<compile_context>
chip_gen: v5e
topology: v5e:2x2
jax: 0.10.0
libtpu: 0.0.40
codegen_flags: <defaults>
</compile_context>

<pallas_src>
import functools

import jax
import jax.numpy as jnp
from jax import lax
from jax.experimental import pallas as pl
from jax.experimental.pallas import tpu as pltpu


def _lstm_fc_kernel(x_ref,        # (T*B, D)   time-major flattened input
                    wih0_ref,     # (D, 4H)    layer-0 input->gates
                    whh0_ref,     # (H, 4H)    layer-0 hidden->gates
                    b0_ref,       # (1, 4H)    layer-0 combined bias (b_ih+b_hh)
                    w1cat_ref,    # (2H, 4H)   layer-1 [W_ih1; W_hh1] stacked
                    b1_ref,       # (1, 4H)    layer-1 combined bias
                    fcw_ref,      # (H, 1)     final linear weight
                    fcb_ref,      # (1, 1)     final linear bias (SMEM)
                    out_ref,      # (B, 1)     output
                    xproj,        # (T*B, 4H)  VMEM scratch: layer-0 gate proj
                    *, batch, hidden_size, seq_len):
    B, H, T = batch, hidden_size, seq_len

    def gate_act(gates):
        # Gate column order is (i, f, o, g): one sigmoid over the first 3H
        # lanes, one tanh over the last H lanes (2 EUP pushes per cell).
        # Lane sub-slices below are the review's "optional micro-opt"; left
        # as-is (XLU relayouts were not shown to be on the critical path).
        sg = jax.nn.sigmoid(gates[:, :3 * H])
        i = sg[:, 0 * H:1 * H]
        f = sg[:, 1 * H:2 * H]
        o = sg[:, 2 * H:3 * H]
        g = jnp.tanh(gates[:, 3 * H:])
        return i, f, o, g

    def cell(gates, c_prev):
        i, f, o, g = gate_act(gates)
        c_new = f * c_prev + i * g
        return o * jnp.tanh(c_new), c_new

    def cell0(gates):                       # peeled t = 0: h_prev = c_prev = 0
        i, _, o, g = gate_act(gates)        # f*c_prev term skipped (exactly 0)
        c_new = i * g
        return o * jnp.tanh(c_new), c_new

    # ---- Layer 0: input->gates projection batched over ALL timesteps. ----
    xproj[...] = (jnp.dot(x_ref[...], wih0_ref[...],
                          preferred_element_type=jnp.float32)
                  + b0_ref[...])

    # Hoisted loop-invariant reads / broadcasts.
    whh0 = whh0_ref[...]                               # (H, 4H)
    w1cat = w1cat_ref[...]                             # (2H, 4H)
    b1 = jnp.broadcast_to(b1_ref[...], (B, 4 * H))     # hoisted broadcast

    # ---- t = 0 (peeled): zero h/c, so skip both h @ W_hh matmuls. ----
    h0, c0 = cell0(xproj[pl.ds(0, B), :])
    # Layer-1 at t=0 sees only h0 (h1_{-1} = 0) -> just the W_ih1 rows.
    h1, c1 = cell0(jnp.dot(h0, w1cat[:H, :],
                           preferred_element_type=jnp.float32) + b1)

    # ---- Wavefront-interleaved recurrence over t = 1 .. T-1. ----
    # h/c live in vregs (loop carries); no VMEM round-trips on the chain.
    def step(t, carry):
        h0, c0, h1, c1 = carry
        off = pl.multiple_of(t * B, B)                 # sublane-aligned rows
        gates0 = (xproj[pl.ds(off, B), :]
                  + jnp.dot(h0, whh0, preferred_element_type=jnp.float32))
        h0, c0 = cell(gates0, c0)
        # Fused layer-1 input + hidden projection: one MXU push per step.
        hcat = jnp.concatenate([h0, h1], axis=-1)      # (B, 2H)
        gates1 = jnp.dot(hcat, w1cat,
                         preferred_element_type=jnp.float32) + b1
        h1, c1 = cell(gates1, c1)
        return h0, c0, h1, c1

    h0, c0, h1, c1 = lax.fori_loop(1, T, step, (h0, c0, h1, c1), unroll=True)

    # ---- fc on the last timestep's top-layer hidden state. ----
    out_ref[...] = (jnp.dot(h1, fcw_ref[...],
                            preferred_element_type=jnp.float32)
                    + fcb_ref[0, 0]).astype(out_ref.dtype)


def lstm_model_forward(x, params, *, hidden_size):
    """x: (B, T, input_size) float32 -> (B, 1) float32."""
    B, T, D = x.shape
    H = hidden_size
    # Time-major, flattened: row t*B + b holds timestep t of batch element b,
    # so one timestep is a contiguous, sublane-aligned block of B rows.
    x_tm = jnp.transpose(x, (1, 0, 2)).reshape(T * B, D)
    # Layer-1 fused operand [W_ih1; W_hh1] -> (2H, 4H).  Built once per call
    # outside the kernel (would be pre-stacked in a real parameter store).
    w1cat = jnp.concatenate([params["wih1"], params["whh1"]], axis=0)

    kernel = functools.partial(_lstm_fc_kernel,
                               batch=B, hidden_size=H, seq_len=T)

    vmem = pl.BlockSpec(memory_space=pltpu.MemorySpace.VMEM)
    smem = pl.BlockSpec(memory_space=pltpu.MemorySpace.SMEM)
    out = pl.pallas_call(
        kernel,
        out_shape=jax.ShapeDtypeStruct((B, 1), jnp.float32),
        in_specs=[vmem,                      # x (T*B, D)
                  vmem, vmem, vmem,          # layer-0 W_ih / W_hh / bias
                  vmem, vmem,                # layer-1 stacked W / bias
                  vmem,                      # fc weight
                  smem],                     # fc bias scalar
        out_specs=vmem,
        scratch_shapes=[
            pltpu.VMEM((T * B, 4 * H), jnp.float32),   # layer-0 gate proj
        ],
    )(x_tm,
      params["wih0"], params["whh0"], params["b0"],
      w1cat, params["b1"],
      params["fcw"], params["fcb"])
    return out


def _reorder_gates(w, H):
    """Permute torch gate blocks (i,f,g,o) -> (i,f,o,g) along axis 0."""
    return jnp.concatenate(
        [w[0:H], w[H:2 * H], w[3 * H:4 * H], w[2 * H:3 * H]], axis=0)


def init_params(key, input_size, hidden_size):
    """Deterministic init mirroring torch.nn.LSTM / Linear parameter shapes,
    pre-transposed and gate-permuted for the kernel layout."""
    H = hidden_size
    k = 1.0 / jnp.sqrt(jnp.float32(H))
    keys = jax.random.split(key, 10)

    def u(kk, shape):
        return jax.random.uniform(kk, shape, jnp.float32, -k, k)

    # torch shapes: weight_ih_l0 (4H, D), weight_hh_l0 (4H, H), biases (4H,)
    w_ih0 = u(keys[0], (4 * H, input_size))
    w_hh0 = u(keys[1], (4 * H, H))
    b_ih0 = u(keys[2], (4 * H,))
    b_hh0 = u(keys[3], (4 * H,))
    w_ih1 = u(keys[4], (4 * H, H))
    w_hh1 = u(keys[5], (4 * H, H))
    b_ih1 = u(keys[6], (4 * H,))
    b_hh1 = u(keys[7], (4 * H,))
    # torch Linear(hidden, 1): weight (1, H), bias (1,)
    fc_w = jax.random.uniform(keys[8], (1, H), jnp.float32, -k, k)
    fc_b = jax.random.uniform(keys[9], (1,), jnp.float32, -k, k)

    r = lambda w: _reorder_gates(w, H)
    return {
        "wih0": r(w_ih0).T,                        # (D, 4H), (i,f,o,g) cols
        "whh0": r(w_hh0).T,                        # (H, 4H)
        "b0":   r(b_ih0 + b_hh0).reshape(1, -1),   # (1, 4H)
        "wih1": r(w_ih1).T,                        # (H, 4H)
        "whh1": r(w_hh1).T,                        # (H, 4H)
        "b1":   r(b_ih1 + b_hh1).reshape(1, -1),   # (1, 4H)
        "fcw":  fc_w.T,                            # (H, 1)
        "fcb":  fc_b.reshape(1, 1),                # (1, 1)
    }


def _reference(x, p, hidden_size):
    """Pure-JAX reference of the same forward (uses the (i,f,o,g) layout)."""
    H = hidden_size
    B, T, _ = x.shape

    def cell(x_t, h, c, wih, whh, b):
        g = x_t @ wih + h @ whh + b
        i = jax.nn.sigmoid(g[:, 0 * H:1 * H])
        f = jax.nn.sigmoid(g[:, 1 * H:2 * H])
        o = jax.nn.sigmoid(g[:, 2 * H:3 * H])
        gg = jnp.tanh(g[:, 3 * H:4 * H])
        c = f * c + i * gg
        h = o * jnp.tanh(c)
        return h, c

    h0 = c0 = h1 = c1 = jnp.zeros((B, H), jnp.float32)
    for t in range(T):
        h0, c0 = cell(x[:, t, :], h0, c0, p["wih0"], p["whh0"], p["b0"])
        h1, c1 = cell(h0, h1, c1, p["wih1"], p["whh1"], p["b1"])
    return h1 @ p["fcw"] + p["fcb"]


if __name__ == "__main__":
    B, T, INPUT_SIZE, HIDDEN = 8, 8, 16, 32

    key = jax.random.PRNGKey(0)
    k_x, k_p = jax.random.split(key)
    x = jax.random.normal(k_x, (B, T, INPUT_SIZE), jnp.float32)
    params = init_params(k_p, INPUT_SIZE, HIDDEN)

    out = jax.block_until_ready(lstm_model_forward(x, params, hidden_size=HIDDEN))

    ref = _reference(x, params, HIDDEN)
    assert out.shape == (B, 1), out.shape
    assert jnp.allclose(out, ref, atol=1e-5, rtol=1e-5), (out, ref)

    print("KERNEL_OK")
</pallas_src>

<mosaic_0001>
module attributes {stable_mosaic.version = 11 : i64} {
  func.func @_lstm_fc_kernel(%arg0: memref<64x16xf32, #tpu.memory_space<vmem>>, %arg1: memref<16x128xf32, #tpu.memory_space<vmem>>, %arg2: memref<32x128xf32, #tpu.memory_space<vmem>>, %arg3: memref<1x128xf32, #tpu.memory_space<vmem>>, %arg4: memref<64x128xf32, #tpu.memory_space<vmem>>, %arg5: memref<1x128xf32, #tpu.memory_space<vmem>>, %arg6: memref<32x1xf32, #tpu.memory_space<vmem>>, %arg7: memref<1x1xf32, #tpu.memory_space<smem>>, %arg8: memref<8x1xf32, #tpu.memory_space<vmem>>, %arg9: memref<64x128xf32, #tpu.memory_space<vmem>>) attributes {dimension_semantics = [], scalar_prefetch = 0 : i64, scratch_operands = 1 : i64, tpu.core_type = #tpu.core_type<tc>} {
    %c0 = arith.constant 0 : index
    %c0_0 = arith.constant 0 : index
    %0 = vector.load %arg0[%c0, %c0_0] : memref<64x16xf32, #tpu.memory_space<vmem>>, vector<64x16xf32>
    %c0_1 = arith.constant 0 : index
    %c0_2 = arith.constant 0 : index
    %1 = vector.load %arg1[%c0_1, %c0_2] : memref<16x128xf32, #tpu.memory_space<vmem>>, vector<16x128xf32>
    %cst = arith.constant dense<0.000000e+00> : vector<64x128xf32>
    %2 = tpu.matmul %0, %1, %cst {dimension_numbers = #tpu.dot_dimension_numbers<[1], [0], [0], [1], [0, 0, 1, 1], [], []>} : vector<64x16xf32>, vector<16x128xf32>, vector<64x128xf32> -> vector<64x128xf32>
    %c0_3 = arith.constant 0 : index
    %c0_4 = arith.constant 0 : index
    %3 = vector.load %arg3[%c0_3, %c0_4] : memref<1x128xf32, #tpu.memory_space<vmem>>, vector<1x128xf32>
    %4 = vector.broadcast %3 : vector<1x128xf32> to vector<64x128xf32>
    %5 = arith.addf %2, %4 : vector<64x128xf32>
    %c0_5 = arith.constant 0 : index
    %c0_6 = arith.constant 0 : index
    %6 = vector.load %arg9[%c0_5, %c0_6] : memref<64x128xf32, #tpu.memory_space<vmem>>, vector<64x128xf32>
    tpu.vector_store %arg9[%c0_5, %c0_6], %5 {strides = array<i32>} : memref<64x128xf32, #tpu.memory_space<vmem>>, vector<64x128xf32>,
    %c0_7 = arith.constant 0 : index
    %c0_8 = arith.constant 0 : index
    %7 = vector.load %arg2[%c0_7, %c0_8] : memref<32x128xf32, #tpu.memory_space<vmem>>, vector<32x128xf32>
    %c0_9 = arith.constant 0 : index
    %c0_10 = arith.constant 0 : index
    %8 = vector.load %arg4[%c0_9, %c0_10] : memref<64x128xf32, #tpu.memory_space<vmem>>, vector<64x128xf32>
    %c0_11 = arith.constant 0 : index
    %c0_12 = arith.constant 0 : index
    %9 = vector.load %arg5[%c0_11, %c0_12] : memref<1x128xf32, #tpu.memory_space<vmem>>, vector<1x128xf32>
    %10 = vector.shape_cast %9 : vector<1x128xf32> to vector<1x128xf32>
    %11 = vector.broadcast %10 : vector<1x128xf32> to vector<8x128xf32>
    %c0_13 = arith.constant 0 : index
    %c0_14 = arith.constant 0 : index
    %12 = vector.load %arg9[%c0_13, %c0_14] : memref<64x128xf32, #tpu.memory_space<vmem>>, vector<8x128xf32>
    %13 = vector.extract_strided_slice %12 {offsets = [0, 0], sizes = [8, 96], strides = [1, 1]} : vector<8x128xf32> to vector<8x96xf32>
    %14 = arith.negf %13 : vector<8x96xf32>
    %15 = math.exp %14 : vector<8x96xf32>
    %cst_15 = arith.constant 1.000000e+00 : f32
    %16 = vector.broadcast %cst_15 : f32 to vector<8x96xf32>
    %17 = arith.addf %16, %15 : vector<8x96xf32>
    %18 = arith.divf %16, %17 : vector<8x96xf32>
    %19 = vector.extract_strided_slice %18 {offsets = [0, 0], sizes = [8, 32], strides = [1, 1]} : vector<8x96xf32> to vector<8x32xf32>
    %20 = vector.extract_strided_slice %18 {offsets = [0, 64], sizes = [8, 32], strides = [1, 1]} : vector<8x96xf32> to vector<8x32xf32>
    %21 = vector.extract_strided_slice %12 {offsets = [0, 96], sizes = [8, 32], strides = [1, 1]} : vector<8x128xf32> to vector<8x32xf32>
    %22 = math.tanh %21 : vector<8x32xf32>
    %23 = arith.mulf %19, %22 : vector<8x32xf32>
    %24 = math.tanh %23 : vector<8x32xf32>
    %25 = arith.mulf %20, %24 : vector<8x32xf32>
    %26 = vector.extract_strided_slice %8 {offsets = [0, 0], sizes = [32, 128], strides = [1, 1]} : vector<64x128xf32> to vector<32x128xf32>
    %cst_16 = arith.constant dense<0.000000e+00> : vector<8x128xf32>
    %27 = tpu.matmul %25, %26, %cst_16 {dimension_numbers = #tpu.dot_dimension_numbers<[1], [0], [0], [1], [0, 0, 1, 1], [], []>} : vector<8x32xf32>, vector<32x128xf32>, vector<8x128xf32> -> vector<8x128xf32>
    %28 = arith.addf %27, %11 : vector<8x128xf32>
    %29 = vector.extract_strided_slice %28 {offsets = [0, 0], sizes = [8, 96], strides = [1, 1]} : vector<8x128xf32> to vector<8x96xf32>
    %30 = arith.negf %29 : vector<8x96xf32>
    %31 = math.exp %30 : vector<8x96xf32>
    %cst_17 = arith.constant 1.000000e+00 : f32
    %32 = vector.broadcast %cst_17 : f32 to vector<8x96xf32>
    %33 = arith.addf %32, %31 : vector<8x96xf32>
    %34 = arith.divf %32, %33 : vector<8x96xf32>
    %35 = vector.extract_strided_slice %34 {offsets = [0, 0], sizes = [8, 32], strides = [1, 1]} : vector<8x96xf32> to vector<8x32xf32>
    %36 = vector.extract_strided_slice %34 {offsets = [0, 64], sizes = [8, 32], strides = [1, 1]} : vector<8x96xf32> to vector<8x32xf32>
    %37 = vector.extract_strided_slice %28 {offsets = [0, 96], sizes = [8, 32], strides = [1, 1]} : vector<8x128xf32> to vector<8x32xf32>
    %38 = math.tanh %37 : vector<8x32xf32>
    %39 = arith.mulf %35, %38 : vector<8x32xf32>
    %40 = math.tanh %39 : vector<8x32xf32>
    %41 = arith.mulf %36, %40 : vector<8x32xf32>
    %c1_i32 = arith.constant 1 : i32
    %c8_i32 = arith.constant 8 : i32
    %42 = arith.muli %c1_i32, %c8_i32 : i32
    %43 = tpu.assume_multiple %42, 8 : i32
    %44 = arith.index_cast %43 : i32 to index
    %c0_18 = arith.constant 0 : index
    %45 = vector.load %arg9[%44, %c0_18] : memref<64x128xf32, #tpu.memory_space<vmem>>, vector<8x128xf32>
    %cst_19 = arith.constant dense<0.000000e+00> : vector<8x128xf32>
    %46 = tpu.matmul %25, %7, %cst_19 {dimension_numbers = #tpu.dot_dimension_numbers<[1], [0], [0], [1], [0, 0, 1, 1], [], []>} : vector<8x32xf32>, vector<32x128xf32>, vector<8x128xf32> -> vector<8x128xf32>
    %47 = arith.addf %45, %46 : vector<8x128xf32>
    %48 = vector.extract_strided_slice %47 {offsets = [0, 0], sizes = [8, 96], strides = [1, 1]} : vector<8x128xf32> to vector<8x96xf32>
    %49 = arith.negf %48 : vector<8x96xf32>
    %50 = math.exp %49 : vector<8x96xf32>
    %cst_20 = arith.constant 1.000000e+00 : f32
    %51 = vector.broadcast %cst_20 : f32 to vector<8x96xf32>
    %52 = arith.addf %51, %50 : vector<8x96xf32>
    %53 = arith.divf %51, %52 : vector<8x96xf32>
    %54 = vector.extract_strided_slice %53 {offsets = [0, 0], sizes = [8, 32], strides = [1, 1]} : vector<8x96xf32> to vector<8x32xf32>
    %55 = vector.extract_strided_slice %53 {offsets = [0, 32], sizes = [8, 32], strides = [1, 1]} : vector<8x96xf32> to vector<8x32xf32>
    %56 = vector.extract_strided_slice %53 {offsets = [0, 64], sizes = [8, 32], strides = [1, 1]} : vector<8x96xf32> to vector<8x32xf32>
    %57 = vector.extract_strided_slice %47 {offsets = [0, 96], sizes = [8, 32], strides = [1, 1]} : vector<8x128xf32> to vector<8x32xf32>
    %58 = math.tanh %57 : vector<8x32xf32>
    %59 = arith.mulf %55, %23 : vector<8x32xf32>
    %60 = arith.mulf %54, %58 : vector<8x32xf32>
    %61 = arith.addf %59, %60 : vector<8x32xf32>
    %62 = math.tanh %61 : vector<8x32xf32>
    %63 = arith.mulf %56, %62 : vector<8x32xf32>
    %64 = tpu.concatenate %63, %41 in 1 : vector<8x32xf32>, vector<8x32xf32> -> vector<8x64xf32>
    %cst_21 = arith.constant dense<0.000000e+00> : vector<8x128xf32>
    %65 = tpu.matmul %64, %8, %cst_21 {dimension_numbers = #tpu.dot_dimension_numbers<[1], [0], [0], [1], [0, 0, 1, 1], [], []>} : vector<8x64xf32>, vector<64x128xf32>, vector<8x128xf32> -> vector<8x128xf32>
    %66 = arith.addf %65, %11 : vector<8x128xf32>
    %67 = vector.extract_strided_slice %66 {offsets = [0, 0], sizes = [8, 96], strides = [1, 1]} : vector<8x128xf32> to vector<8x96xf32>
    %68 = arith.negf %67 : vector<8x96xf32>
    %69 = math.exp %68 : vector<8x96xf32>
    %cst_22 = arith.constant 1.000000e+00 : f32
    %70 = vector.broadcast %cst_22 : f32 to vector<8x96xf32>
    %71 = arith.addf %70, %69 : vector<8x96xf32>
    %72 = arith.divf %70, %71 : vector<8x96xf32>
    %73 = vector.extract_strided_slice %72 {offsets = [0, 0], sizes = [8, 32], strides = [1, 1]} : vector<8x96xf32> to vector<8x32xf32>
    %74 = vector.extract_strided_slice %72 {offsets = [0, 32], sizes = [8, 32], strides = [1, 1]} : vector<8x96xf32> to vector<8x32xf32>
    %75 = vector.extract_strided_slice %72 {offsets = [0, 64], sizes = [8, 32], strides = [1, 1]} : vector<8x96xf32> to vector<8x32xf32>
    %76 = vector.extract_strided_slice %66 {offsets = [0, 96], sizes = [8, 32], strides = [1, 1]} : vector<8x128xf32> to vector<8x32xf32>
    %77 = math.tanh %76 : vector<8x32xf32>
    %78 = arith.mulf %74, %39 : vector<8x32xf32>
    %79 = arith.mulf %73, %77 : vector<8x32xf32>
    %80 = arith.addf %78, %79 : vector<8x32xf32>
    %81 = math.tanh %80 : vector<8x32xf32>
    %82 = arith.mulf %75, %81 : vector<8x32xf32>
    %c2_i32 = arith.constant 2 : i32
    %c8_i32_23 = arith.constant 8 : i32
    %83 = arith.muli %c2_i32, %c8_i32_23 : i32
    %84 = tpu.assume_multiple %83, 8 : i32
    %85 = arith.index_cast %84 : i32 to index
    %c0_24 = arith.constant 0 : index
    %86 = vector.load %arg9[%85, %c0_24] : memref<64x128xf32, #tpu.memory_space<vmem>>, vector<8x128xf32>
    %cst_25 = arith.constant dense<0.000000e+00> : vector<8x128xf32>
    %87 = tpu.matmul %63, %7, %cst_25 {dimension_numbers = #tpu.dot_dimension_numbers<[1], [0], [0], [1], [0, 0, 1, 1], [], []>} : vector<8x32xf32>, vector<32x128xf32>, vector<8x128xf32> -> vector<8x128xf32>
    %88 = arith.addf %86, %87 : vector<8x128xf32>
    %89 = vector.extract_strided_slice %88 {offsets = [0, 0], sizes = [8, 96], strides = [1, 1]} : vector<8x128xf32> to vector<8x96xf32>
    %90 = arith.negf %89 : vector<8x96xf32>
    %91 = math.exp %90 : vector<8x96xf32>
    %cst_26 = arith.constant 1.000000e+00 : f32
    %92 = vector.broadcast %cst_26 : f32 to vector<8x96xf32>
    %93 = arith.addf %92, %91 : vector<8x96xf32>
    %94 = arith.divf %92, %93 : vector<8x96xf32>
    %95 = vector.extract_strided_slice %94 {offsets = [0, 0], sizes = [8, 32], strides = [1, 1]} : vector<8x96xf32> to vector<8x32xf32>
    %96 = vector.extract_strided_slice %94 {offsets = [0, 32], sizes = [8, 32], strides = [1, 1]} : vector<8x96xf32> to vector<8x32xf32>
    %97 = vector.extract_strided_slice %94 {offsets = [0, 64], sizes = [8, 32], strides = [1, 1]} : vector<8x96xf32> to vector<8x32xf32>
    %98 = vector.extract_strided_slice %88 {offsets = [0, 96], sizes = [8, 32], strides = [1, 1]} : vector<8x128xf32> to vector<8x32xf32>
    %99 = math.tanh %98 : vector<8x32xf32>
    %100 = arith.mulf %96, %61 : vector<8x32xf32>
    %101 = arith.mulf %95, %99 : vector<8x32xf32>
    %102 = arith.addf %100, %101 : vector<8x32xf32>
    %103 = math.tanh %102 : vector<8x32xf32>
    %104 = arith.mulf %97, %103 : vector<8x32xf32>
    %105 = tpu.concatenate %104, %82 in 1 : vector<8x32xf32>, vector<8x32xf32> -> vector<8x64xf32>
    %cst_27 = arith.constant dense<0.000000e+00> : vector<8x128xf32>
    %106 = tpu.matmul %105, %8, %cst_27 {dimension_numbers = #tpu.dot_dimension_numbers<[1], [0], [0], [1], [0, 0, 1, 1], [], []>} : vector<8x64xf32>, vector<64x128xf32>, vector<8x128xf32> -> vector<8x128xf32>
    %107 = arith.addf %106, %11 : vector<8x128xf32>
    %108 = vector.extract_strided_slice %107 {offsets = [0, 0], sizes = [8, 96], strides = [1, 1]} : vector<8x128xf32> to vector<8x96xf32>
    %109 = arith.negf %108 : vector<8x96xf32>
    %110 = math.exp %109 : vector<8x96xf32>
    %cst_28 = arith.constant 1.000000e+00 : f32
    %111 = vector.broadcast %cst_28 : f32 to vector<8x96xf32>
    %112 = arith.addf %111, %110 : vector<8x96xf32>
    %113 = arith.divf %111, %112 : vector<8x96xf32>
    %114 = vector.extract_strided_slice %113 {offsets = [0, 0], sizes = [8, 32], strides = [1, 1]} : vector<8x96xf32> to vector<8x32xf32>
    %115 = vector.extract_strided_slice %113 {offsets = [0, 32], sizes = [8, 32], strides = [1, 1]} : vector<8x96xf32> to vector<8x32xf32>
    %116 = vector.extract_strided_slice %113 {offsets = [0, 64], sizes = [8, 32], strides = [1, 1]} : vector<8x96xf32> to vector<8x32xf32>
    %117 = vector.extract_strided_slice %107 {offsets = [0, 96], sizes = [8, 32], strides = [1, 1]} : vector<8x128xf32> to vector<8x32xf32>
    %118 = math.tanh %117 : vector<8x32xf32>
    %119 = arith.mulf %115, %80 : vector<8x32xf32>
    %120 = arith.mulf %114, %118 : vector<8x32xf32>
    %121 = arith.addf %119, %120 : vector<8x32xf32>
    %122 = math.tanh %121 : vector<8x32xf32>
    %123 = arith.mulf %116, %122 : vector<8x32xf32>
    %c3_i32 = arith.constant 3 : i32
    %c8_i32_29 = arith.constant 8 : i32
    %124 = arith.muli %c3_i32, %c8_i32_29 : i32
    %125 = tpu.assume_multiple %124, 8 : i32
    %126 = arith.index_cast %125 : i32 to index
    %c0_30 = arith.constant 0 : index
    %127 = vector.load %arg9[%126, %c0_30] : memref<64x128xf32, #tpu.memory_space<vmem>>, vector<8x128xf32>
    %cst_31 = arith.constant dense<0.000000e+00> : vector<8x128xf32>
    %128 = tpu.matmul %104, %7, %cst_31 {dimension_numbers = #tpu.dot_dimension_numbers<[1], [0], [0], [1], [0, 0, 1, 1], [], []>} : vector<8x32xf32>, vector<32x128xf32>, vector<8x128xf32> -> vector<8x128xf32>
    %129 = arith.addf %127, %128 : vector<8x128xf32>
    %130 = vector.extract_strided_slice %129 {offsets = [0, 0], sizes = [8, 96], strides = [1, 1]} : vector<8x128xf32> to vector<8x96xf32>
    %131 = arith.negf %130 : vector<8x96xf32>
    %132 = math.exp %131 : vector<8x96xf32>
    %cst_32 = arith.constant 1.000000e+00 : f32
    %133 = vector.broadcast %cst_32 : f32 to vector<8x96xf32>
    %134 = arith.addf %133, %132 : vector<8x96xf32>
    %135 = arith.divf %133, %134 : vector<8x96xf32>
    %136 = vector.extract_strided_slice %135 {offsets = [0, 0], sizes = [8, 32], strides = [1, 1]} : vector<8x96xf32> to vector<8x32xf32>
    %137 = vector.extract_strided_slice %135 {offsets = [0, 32], sizes = [8, 32], strides = [1, 1]} : vector<8x96xf32> to vector<8x32xf32>
    %138 = vector.extract_strided_slice %135 {offsets = [0, 64], sizes = [8, 32], strides = [1, 1]} : vector<8x96xf32> to vector<8x32xf32>
    %139 = vector.extract_strided_slice %129 {offsets = [0, 96], sizes = [8, 32], strides = [1, 1]} : vector<8x128xf32> to vector<8x32xf32>
    %140 = math.tanh %139 : vector<8x32xf32>
    %141 = arith.mulf %137, %102 : vector<8x32xf32>
    %142 = arith.mulf %136, %140 : vector<8x32xf32>
    %143 = arith.addf %141, %142 : vector<8x32xf32>
    %144 = math.tanh %143 : vector<8x32xf32>
    %145 = arith.mulf %138, %144 : vector<8x32xf32>
    %146 = tpu.concatenate %145, %123 in 1 : vector<8x32xf32>, vector<8x32xf32> -> vector<8x64xf32>
    %cst_33 = arith.constant dense<0.000000e+00> : vector<8x128xf32>
    %147 = tpu.matmul %146, %8, %cst_33 {dimension_numbers = #tpu.dot_dimension_numbers<[1], [0], [0], [1], [0, 0, 1, 1], [], []>} : vector<8x64xf32>, vector<64x128xf32>, vector<8x128xf32> -> vector<8x128xf32>
    %148 = arith.addf %147, %11 : vector<8x128xf32>
    %149 = vector.extract_strided_slice %148 {offsets = [0, 0], sizes = [8, 96], strides = [1, 1]} : vector<8x128xf32> to vector<8x96xf32>
    %150 = arith.negf %149 : vector<8x96xf32>
    %151 = math.exp %150 : vector<8x96xf32>
    %cst_34 = arith.constant 1.000000e+00 : f32
    %152 = vector.broadcast %cst_34 : f32 to vector<8x96xf32>
    %153 = arith.addf %152, %151 : vector<8x96xf32>
    %154 = arith.divf %152, %153 : vector<8x96xf32>
    %155 = vector.extract_strided_slice %154 {offsets = [0, 0], sizes = [8, 32], strides = [1, 1]} : vector<8x96xf32> to vector<8x32xf32>
    %156 = vector.extract_strided_slice %154 {offsets = [0, 32], sizes = [8, 32], strides = [1, 1]} : vector<8x96xf32> to vector<8x32xf32>
    %157 = vector.extract_strided_slice %154 {offsets = [0, 64], sizes = [8, 32], strides = [1, 1]} : vector<8x96xf32> to vector<8x32xf32>
    %158 = vector.extract_strided_slice %148 {offsets = [0, 96], sizes = [8, 32], strides = [1, 1]} : vector<8x128xf32> to vector<8x32xf32>
    %159 = math.tanh %158 : vector<8x32xf32>
    %160 = arith.mulf %156, %121 : vector<8x32xf32>
    %161 = arith.mulf %155, %159 : vector<8x32xf32>
    %162 = arith.addf %160, %161 : vector<8x32xf32>
    %163 = math.tanh %162 : vector<8x32xf32>
    %164 = arith.mulf %157, %163 : vector<8x32xf32>
    %c4_i32 = arith.constant 4 : i32
    %c8_i32_35 = arith.constant 8 : i32
    %165 = arith.muli %c4_i32, %c8_i32_35 : i32
    %166 = tpu.assume_multiple %165, 8 : i32
    %167 = arith.index_cast %166 : i32 to index
    %c0_36 = arith.constant 0 : index
    %168 = vector.load %arg9[%167, %c0_36] : memref<64x128xf32, #tpu.memory_space<vmem>>, vector<8x128xf32>
    %cst_37 = arith.constant dense<0.000000e+00> : vector<8x128xf32>
    %169 = tpu.matmul %145, %7, %cst_37 {dimension_numbers = #tpu.dot_dimension_numbers<[1], [0], [0], [1], [0, 0, 1, 1], [], []>} : vector<8x32xf32>, vector<32x128xf32>, vector<8x128xf32> -> vector<8x128xf32>
    %170 = arith.addf %168, %169 : vector<8x128xf32>
    %171 = vector.extract_strided_slice %170 {offsets = [0, 0], sizes = [8, 96], strides = [1, 1]} : vector<8x128xf32> to vector<8x96xf32>
    %172 = arith.negf %171 : vector<8x96xf32>
    %173 = math.exp %172 : vector<8x96xf32>
    %cst_38 = arith.constant 1.000000e+00 : f32
    %174 = vector.broadcast %cst_38 : f32 to vector<8x96xf32>
    %175 = arith.addf %174, %173 : vector<8x96xf32>
    %176 = arith.divf %174, %175 : vector<8x96xf32>
    %177 = vector.extract_strided_slice %176 {offsets = [0, 0], sizes = [8, 32], strides = [1, 1]} : vector<8x96xf32> to vector<8x32xf32>
    %178 = vector.extract_strided_slice %176 {offsets = [0, 32], sizes = [8, 32], strides = [1, 1]} : vector<8x96xf32> to vector<8x32xf32>
    %179 = vector.extract_strided_slice %176 {offsets = [0, 64], sizes = [8, 32], strides = [1, 1]} : vector<8x96xf32> to vector<8x32xf32>
    %180 = vector.extract_strided_slice %170 {offsets = [0, 96], sizes = [8, 32], strides = [1, 1]} : vector<8x128xf32> to vector<8x32xf32>
    %181 = math.tanh %180 : vector<8x32xf32>
    %182 = arith.mulf %178, %143 : vector<8x32xf32>
    %183 = arith.mulf %177, %181 : vector<8x32xf32>
    %184 = arith.addf %182, %183 : vector<8x32xf32>
    %185 = math.tanh %184 : vector<8x32xf32>
    %186 = arith.mulf %179, %185 : vector<8x32xf32>
    %187 = tpu.concatenate %186, %164 in 1 : vector<8x32xf32>, vector<8x32xf32> -> vector<8x64xf32>
    %cst_39 = arith.constant dense<0.000000e+00> : vector<8x128xf32>
    %188 = tpu.matmul %187, %8, %cst_39 {dimension_numbers = #tpu.dot_dimension_numbers<[1], [0], [0], [1], [0, 0, 1, 1], [], []>} : vector<8x64xf32>, vector<64x128xf32>, vector<8x128xf32> -> vector<8x128xf32>
    %189 = arith.addf %188, %11 : vector<8x128xf32>
    %190 = vector.extract_strided_slice %189 {offsets = [0, 0], sizes = [8, 96], strides = [1, 1]} : vector<8x128xf32> to vector<8x96xf32>
    %191 = arith.negf %190 : vector<8x96xf32>
    %192 = math.exp %191 : vector<8x96xf32>
    %cst_40 = arith.constant 1.000000e+00 : f32
    %193 = vector.broadcast %cst_40 : f32 to vector<8x96xf32>
    %194 = arith.addf %193, %192 : vector<8x96xf32>
    %195 = arith.divf %193, %194 : vector<8x96xf32>
    %196 = vector.extract_strided_slice %195 {offsets = [0, 0], sizes = [8, 32], strides = [1, 1]} : vector<8x96xf32> to vector<8x32xf32>
    %197 = vector.extract_strided_slice %195 {offsets = [0, 32], sizes = [8, 32], strides = [1, 1]} : vector<8x96xf32> to vector<8x32xf32>
    %198 = vector.extract_strided_slice %195 {offsets = [0, 64], sizes = [8, 32], strides = [1, 1]} : vector<8x96xf32> to vector<8x32xf32>
    %199 = vector.extract_strided_slice %189 {offsets = [0, 96], sizes = [8, 32], strides = [1, 1]} : vector<8x128xf32> to vector<8x32xf32>
    %200 = math.tanh %199 : vector<8x32xf32>
    %201 = arith.mulf %197, %162 : vector<8x32xf32>
    %202 = arith.mulf %196, %200 : vector<8x32xf32>
    %203 = arith.addf %201, %202 : vector<8x32xf32>
    %204 = math.tanh %203 : vector<8x32xf32>
    %205 = arith.mulf %198, %204 : vector<8x32xf32>
    %c5_i32 = arith.constant 5 : i32
    %c8_i32_41 = arith.constant 8 : i32
    %206 = arith.muli %c5_i32, %c8_i32_41 : i32
    %207 = tpu.assume_multiple %206, 8 : i32
    %208 = arith.index_cast %207 : i32 to index
    %c0_42 = arith.constant 0 : index
    %209 = vector.load %arg9[%208, %c0_42] : memref<64x128xf32, #tpu.memory_space<vmem>>, vector<8x128xf32>
    %cst_43 = arith.constant dense<0.000000e+00> : vector<8x128xf32>
    %210 = tpu.matmul %186, %7, %cst_43 {dimension_numbers = #tpu.dot_dimension_numbers<[1], [0], [0], [1], [0, 0, 1, 1], [], []>} : vector<8x32xf32>, vector<32x128xf32>, vector<8x128xf32> -> vector<8x128xf32>
    %211 = arith.addf %209, %210 : vector<8x128xf32>
    %212 = vector.extract_strided_slice %211 {offsets = [0, 0], sizes = [8, 96], strides = [1, 1]} : vector<8x128xf32> to vector<8x96xf32>
    %213 = arith.negf %212 : vector<8x96xf32>
    %214 = math.exp %213 : vector<8x96xf32>
    %cst_44 = arith.constant 1.000000e+00 : f32
    %215 = vector.broadcast %cst_44 : f32 to vector<8x96xf32>
    %216 = arith.addf %215, %214 : vector<8x96xf32>
    %217 = arith.divf %215, %216 : vector<8x96xf32>
    %218 = vector.extract_strided_slice %217 {offsets = [0, 0], sizes = [8, 32], strides = [1, 1]} : vector<8x96xf32> to vector<8x32xf32>
    %219 = vector.extract_strided_slice %217 {offsets = [0, 32], sizes = [8, 32], strides = [1, 1]} : vector<8x96xf32> to vector<8x32xf32>
    %220 = vector.extract_strided_slice %217 {offsets = [0, 64], sizes = [8, 32], strides = [1, 1]} : vector<8x96xf32> to vector<8x32xf32>
    %221 = vector.extract_strided_slice %211 {offsets = [0, 96], sizes = [8, 32], strides = [1, 1]} : vector<8x128xf32> to vector<8x32xf32>
    %222 = math.tanh %221 : vector<8x32xf32>
    %223 = arith.mulf %219, %184 : vector<8x32xf32>
    %224 = arith.mulf %218, %222 : vector<8x32xf32>
    %225 = arith.addf %223, %224 : vector<8x32xf32>
    %226 = math.tanh %225 : vector<8x32xf32>
    %227 = arith.mulf %220, %226 : vector<8x32xf32>
    %228 = tpu.concatenate %227, %205 in 1 : vector<8x32xf32>, vector<8x32xf32> -> vector<8x64xf32>
    %cst_45 = arith.constant dense<0.000000e+00> : vector<8x128xf32>
    %229 = tpu.matmul %228, %8, %cst_45 {dimension_numbers = #tpu.dot_dimension_numbers<[1], [0], [0], [1], [0, 0, 1, 1], [], []>} : vector<8x64xf32>, vector<64x128xf32>, vector<8x128xf32> -> vector<8x128xf32>
    %230 = arith.addf %229, %11 : vector<8x128xf32>
    %231 = vector.extract_strided_slice %230 {offsets = [0, 0], sizes = [8, 96], strides = [1, 1]} : vector<8x128xf32> to vector<8x96xf32>
    %232 = arith.negf %231 : vector<8x96xf32>
    %233 = math.exp %232 : vector<8x96xf32>
    %cst_46 = arith.constant 1.000000e+00 : f32
    %234 = vector.broadcast %cst_46 : f32 to vector<8x96xf32>
    %235 = arith.addf %234, %233 : vector<8x96xf32>
    %236 = arith.divf %234, %235 : vector<8x96xf32>
    %237 = vector.extract_strided_slice %236 {offsets = [0, 0], sizes = [8, 32], strides = [1, 1]} : vector<8x96xf32> to vector<8x32xf32>
    %238 = vector.extract_strided_slice %236 {offsets = [0, 32], sizes = [8, 32], strides = [1, 1]} : vector<8x96xf32> to vector<8x32xf32>
    %239 = vector.extract_strided_slice %236 {offsets = [0, 64], sizes = [8, 32], strides = [1, 1]} : vector<8x96xf32> to vector<8x32xf32>
    %240 = vector.extract_strided_slice %230 {offsets = [0, 96], sizes = [8, 32], strides = [1, 1]} : vector<8x128xf32> to vector<8x32xf32>
    %241 = math.tanh %240 : vector<8x32xf32>
    %242 = arith.mulf %238, %203 : vector<8x32xf32>
    %243 = arith.mulf %237, %241 : vector<8x32xf32>
    %244 = arith.addf %242, %243 : vector<8x32xf32>
    %245 = math.tanh %244 : vector<8x32xf32>
    %246 = arith.mulf %239, %245 : vector<8x32xf32>
    %c6_i32 = arith.constant 6 : i32
    %c8_i32_47 = arith.constant 8 : i32
    %247 = arith.muli %c6_i32, %c8_i32_47 : i32
    %248 = tpu.assume_multiple %247, 8 : i32
    %249 = arith.index_cast %248 : i32 to index
    %c0_48 = arith.constant 0 : index
    %250 = vector.load %arg9[%249, %c0_48] : memref<64x128xf32, #tpu.memory_space<vmem>>, vector<8x128xf32>
    %cst_49 = arith.constant dense<0.000000e+00> : vector<8x128xf32>
    %251 = tpu.matmul %227, %7, %cst_49 {dimension_numbers = #tpu.dot_dimension_numbers<[1], [0], [0], [1], [0, 0, 1, 1], [], []>} : vector<8x32xf32>, vector<32x128xf32>, vector<8x128xf32> -> vector<8x128xf32>
    %252 = arith.addf %250, %251 : vector<8x128xf32>
    %253 = vector.extract_strided_slice %252 {offsets = [0, 0], sizes = [8, 96], strides = [1, 1]} : vector<8x128xf32> to vector<8x96xf32>
    %254 = arith.negf %253 : vector<8x96xf32>
    %255 = math.exp %254 : vector<8x96xf32>
    %cst_50 = arith.constant 1.000000e+00 : f32
    %256 = vector.broadcast %cst_50 : f32 to vector<8x96xf32>
    %257 = arith.addf %256, %255 : vector<8x96xf32>
    %258 = arith.divf %256, %257 : vector<8x96xf32>
    %259 = vector.extract_strided_slice %258 {offsets = [0, 0], sizes = [8, 32], strides = [1, 1]} : vector<8x96xf32> to vector<8x32xf32>
    %260 = vector.extract_strided_slice %258 {offsets = [0, 32], sizes = [8, 32], strides = [1, 1]} : vector<8x96xf32> to vector<8x32xf32>
    %261 = vector.extract_strided_slice %258 {offsets = [0, 64], sizes = [8, 32], strides = [1, 1]} : vector<8x96xf32> to vector<8x32xf32>
    %262 = vector.extract_strided_slice %252 {offsets = [0, 96], sizes = [8, 32], strides = [1, 1]} : vector<8x128xf32> to vector<8x32xf32>
    %263 = math.tanh %262 : vector<8x32xf32>
    %264 = arith.mulf %260, %225 : vector<8x32xf32>
    %265 = arith.mulf %259, %263 : vector<8x32xf32>
    %266 = arith.addf %264, %265 : vector<8x32xf32>
    %267 = math.tanh %266 : vector<8x32xf32>
    %268 = arith.mulf %261, %267 : vector<8x32xf32>
    %269 = tpu.concatenate %268, %246 in 1 : vector<8x32xf32>, vector<8x32xf32> -> vector<8x64xf32>
    %cst_51 = arith.constant dense<0.000000e+00> : vector<8x128xf32>
    %270 = tpu.matmul %269, %8, %cst_51 {dimension_numbers = #tpu.dot_dimension_numbers<[1], [0], [0], [1], [0, 0, 1, 1], [], []>} : vector<8x64xf32>, vector<64x128xf32>, vector<8x128xf32> -> vector<8x128xf32>
    %271 = arith.addf %270, %11 : vector<8x128xf32>
    %272 = vector.extract_strided_slice %271 {offsets = [0, 0], sizes = [8, 96], strides = [1, 1]} : vector<8x128xf32> to vector<8x96xf32>
    %273 = arith.negf %272 : vector<8x96xf32>
    %274 = math.exp %273 : vector<8x96xf32>
    %cst_52 = arith.constant 1.000000e+00 : f32
    %275 = vector.broadcast %cst_52 : f32 to vector<8x96xf32>
    %276 = arith.addf %275, %274 : vector<8x96xf32>
    %277 = arith.divf %275, %276 : vector<8x96xf32>
    %278 = vector.extract_strided_slice %277 {offsets = [0, 0], sizes = [8, 32], strides = [1, 1]} : vector<8x96xf32> to vector<8x32xf32>
    %279 = vector.extract_strided_slice %277 {offsets = [0, 32], sizes = [8, 32], strides = [1, 1]} : vector<8x96xf32> to vector<8x32xf32>
    %280 = vector.extract_strided_slice %277 {offsets = [0, 64], sizes = [8, 32], strides = [1, 1]} : vector<8x96xf32> to vector<8x32xf32>
    %281 = vector.extract_strided_slice %271 {offsets = [0, 96], sizes = [8, 32], strides = [1, 1]} : vector<8x128xf32> to vector<8x32xf32>
    %282 = math.tanh %281 : vector<8x32xf32>
    %283 = arith.mulf %279, %244 : vector<8x32xf32>
    %284 = arith.mulf %278, %282 : vector<8x32xf32>
    %285 = arith.addf %283, %284 : vector<8x32xf32>
    %286 = math.tanh %285 : vector<8x32xf32>
    %287 = arith.mulf %280, %286 : vector<8x32xf32>
    %c7_i32 = arith.constant 7 : i32
    %c8_i32_53 = arith.constant 8 : i32
    %288 = arith.muli %c7_i32, %c8_i32_53 : i32
    %289 = tpu.assume_multiple %288, 8 : i32
    %290 = arith.index_cast %289 : i32 to index
    %c0_54 = arith.constant 0 : index
    %291 = vector.load %arg9[%290, %c0_54] : memref<64x128xf32, #tpu.memory_space<vmem>>, vector<8x128xf32>
    %cst_55 = arith.constant dense<0.000000e+00> : vector<8x128xf32>
    %292 = tpu.matmul %268, %7, %cst_55 {dimension_numbers = #tpu.dot_dimension_numbers<[1], [0], [0], [1], [0, 0, 1, 1], [], []>} : vector<8x32xf32>, vector<32x128xf32>, vector<8x128xf32> -> vector<8x128xf32>
    %293 = arith.addf %291, %292 : vector<8x128xf32>
    %294 = vector.extract_strided_slice %293 {offsets = [0, 0], sizes = [8, 96], strides = [1, 1]} : vector<8x128xf32> to vector<8x96xf32>
    %295 = arith.negf %294 : vector<8x96xf32>
    %296 = math.exp %295 : vector<8x96xf32>
    %cst_56 = arith.constant 1.000000e+00 : f32
    %297 = vector.broadcast %cst_56 : f32 to vector<8x96xf32>
    %298 = arith.addf %297, %296 : vector<8x96xf32>
    %299 = arith.divf %297, %298 : vector<8x96xf32>
    %300 = vector.extract_strided_slice %299 {offsets = [0, 0], sizes = [8, 32], strides = [1, 1]} : vector<8x96xf32> to vector<8x32xf32>
    %301 = vector.extract_strided_slice %299 {offsets = [0, 32], sizes = [8, 32], strides = [1, 1]} : vector<8x96xf32> to vector<8x32xf32>
    %302 = vector.extract_strided_slice %299 {offsets = [0, 64], sizes = [8, 32], strides = [1, 1]} : vector<8x96xf32> to vector<8x32xf32>
    %303 = vector.extract_strided_slice %293 {offsets = [0, 96], sizes = [8, 32], strides = [1, 1]} : vector<8x128xf32> to vector<8x32xf32>
    %304 = math.tanh %303 : vector<8x32xf32>
    %305 = arith.mulf %301, %266 : vector<8x32xf32>
    %306 = arith.mulf %300, %304 : vector<8x32xf32>
    %307 = arith.addf %305, %306 : vector<8x32xf32>
    %308 = math.tanh %307 : vector<8x32xf32>
    %309 = arith.mulf %302, %308 : vector<8x32xf32>
    %310 = tpu.concatenate %309, %287 in 1 : vector<8x32xf32>, vector<8x32xf32> -> vector<8x64xf32>
    %cst_57 = arith.constant dense<0.000000e+00> : vector<8x128xf32>
    %311 = tpu.matmul %310, %8, %cst_57 {dimension_numbers = #tpu.dot_dimension_numbers<[1], [0], [0], [1], [0, 0, 1, 1], [], []>} : vector<8x64xf32>, vector<64x128xf32>, vector<8x128xf32> -> vector<8x128xf32>
    %312 = arith.addf %311, %11 : vector<8x128xf32>
    %313 = vector.extract_strided_slice %312 {offsets = [0, 0], sizes = [8, 96], strides = [1, 1]} : vector<8x128xf32> to vector<8x96xf32>
    %314 = arith.negf %313 : vector<8x96xf32>
    %315 = math.exp %314 : vector<8x96xf32>
    %cst_58 = arith.constant 1.000000e+00 : f32
    %316 = vector.broadcast %cst_58 : f32 to vector<8x96xf32>
    %317 = arith.addf %316, %315 : vector<8x96xf32>
    %318 = arith.divf %316, %317 : vector<8x96xf32>
    %319 = vector.extract_strided_slice %318 {offsets = [0, 0], sizes = [8, 32], strides = [1, 1]} : vector<8x96xf32> to vector<8x32xf32>
    %320 = vector.extract_strided_slice %318 {offsets = [0, 32], sizes = [8, 32], strides = [1, 1]} : vector<8x96xf32> to vector<8x32xf32>
    %321 = vector.extract_strided_slice %318 {offsets = [0, 64], sizes = [8, 32], strides = [1, 1]} : vector<8x96xf32> to vector<8x32xf32>
    %322 = vector.extract_strided_slice %312 {offsets = [0, 96], sizes = [8, 32], strides = [1, 1]} : vector<8x128xf32> to vector<8x32xf32>
    %323 = math.tanh %322 : vector<8x32xf32>
    %324 = arith.mulf %320, %285 : vector<8x32xf32>
    %325 = arith.mulf %319, %323 : vector<8x32xf32>
    %326 = arith.addf %324, %325 : vector<8x32xf32>
    %327 = math.tanh %326 : vector<8x32xf32>
    %328 = arith.mulf %321, %327 : vector<8x32xf32>
    %c7_i32_59 = arith.constant 7 : i32
    %c0_60 = arith.constant 0 : index
    %c0_61 = arith.constant 0 : index
    %329 = vector.load %arg6[%c0_60, %c0_61] : memref<32x1xf32, #tpu.memory_space<vmem>>, vector<32x1xf32>
    %cst_62 = arith.constant dense<0.000000e+00> : vector<8x1xf32>
    %330 = tpu.matmul %328, %329, %cst_62 {dimension_numbers = #tpu.dot_dimension_numbers<[1], [0], [0], [1], [0, 0, 1, 1], [], []>} : vector<8x32xf32>, vector<32x1xf32>, vector<8x1xf32> -> vector<8x1xf32>
    %c0_63 = arith.constant 0 : index
    %c0_64 = arith.constant 0 : index
    %331 = memref.load %arg7[%c0_63, %c0_64] : memref<1x1xf32, #tpu.memory_space<smem>>
    %332 = vector.broadcast %331 : f32 to vector<8x1xf32>
    %333 = arith.addf %330, %332 : vector<8x1xf32>
    %c0_65 = arith.constant 0 : index
    %c0_66 = arith.constant 0 : index
    %334 = vector.load %arg8[%c0_65, %c0_66] : memref<8x1xf32, #tpu.memory_space<vmem>>, vector<8x1xf32>
    tpu.vector_store %arg8[%c0_65, %c0_66], %333 {strides = array<i32>} : memref<8x1xf32, #tpu.memory_space<vmem>>, vector<8x1xf32>,
    return
  }
}

</mosaic_0001>

<llo_original>
// kernel: tpu_custom_call.1
$region0: #{tpu_custom_call.1}
  #allocation0 [shape = 'u32[]', space=smem, size = 0x4, offset = 0x4, fixed_abs, tag = 'smem constant byte address 0x4 - core index']
  #allocation1 [shape = 'u32[72,128]{1,0:T(1,128)}', space=vmem, size = 0x9000, scoped, tag = 'internal scratch']
  #allocation2 [shape = 'f32[64,128]{1,0:T(8,128)}', space=vmem, size = 0x8000, scoped, tag = 'scratch operand']
  #allocation3 [shape = 'f32[1,1]{1,0:T(1,128)S(6)}', space=smem, size = 0x200, scoped, tag = 'scoped memory for tpu_custom_call.1']
  %s0 = inlined_call_operand.vmem [shape: f32[64,16], index: 0, kind: input, shape index: {}]
  %s1 = inlined_call_operand.hbm [shape: f32[16,128], index: 1, kind: input, shape index: {}]
  %s2 = inlined_call_operand.vmem [shape: f32[32,128], index: 2, kind: input, shape index: {}]
  %s3 = inlined_call_operand.vmem [shape: f32[1,128], index: 3, kind: input, shape index: {}]
  %s4 = inlined_call_operand.vmem [shape: f32[64,128], index: 4, kind: input, shape index: {}]
  %s5 = inlined_call_operand.vmem [shape: f32[1,128], index: 5, kind: input, shape index: {}]
  %s6 = inlined_call_operand.vmem [shape: f32[32,1], index: 6, kind: input, shape index: {}]
  %s7 = inlined_call_operand.<no memory space> [shape: f32[1,1], index: 7, kind: input, shape index: {}]
  %s8 = inlined_call_operand.vmem [shape: f32[8,1], index: 8, kind: output, shape index: {}]
  %s9 = sld [smem:[#allocation0]]
  $region46: #{tpu_custom_call.1} parent=0
    _
  %s11 = ssub.s32 1, %s9
  %s12 = scalar_select 0, %s11, %s9
  %13 = sst [smem:[#allocation3]] %s7
  $region1: #{tpu_custom_call.1} parent=0
    #allocation4 [shape = 'u8[8192]{0}', space=vmem, size = 0x2000, scoped, tag = 'input window, operand 1, single buffered']
    #allocation5 [shape = 's32[1]{0}', space=sflag, size = 0x4, scoped, tag = 'scoped memory for tpu_custom_call.1']
    %14 = vsyncpa [#allocation5], 0
    // Predicated region
    $region2: #{tpu_custom_call.1} parent=1 // pred_check
      _
    $region3: #{tpu_custom_call.1} parent=1 // pred_check_branch
      %16 = sbr.rel (0) target = $region5
    $region4: #{tpu_custom_call.1} parent=1 // pred_region
      _
    $region5: #{tpu_custom_call.1} parent=1 // pred_fallthru
      _
    // Predicated region
    $region6: #{tpu_custom_call.1} parent=1 // pred_check
      _
    $region7: #{tpu_custom_call.1} parent=1 // pred_check_branch
      %18 = sbr.rel (0) target = $region9
    $region8: #{tpu_custom_call.1} parent=1 // pred_region
      %20 = vsyncadd [#allocation5], 0
      %s21 = sshll.u32 %s1, 4
      %s22 = int_to_ptr.hbm [resolvable:$true] %s21
      %s23 = sshll.u32 [#allocation4], 4
      %s24 = int_to_ptr.vmem [resolvable:$true] %s23
      %29 = dma.hbm_to_vmem [thread:$0]  %s22, 256, %s24, [#allocation5], 128, 128, 8
    $region9: #{tpu_custom_call.1} parent=1 // pred_fallthru
      _
    // Predicated region
    $region10: #{tpu_custom_call.1} parent=1 // pred_check
      _
    $region11: #{tpu_custom_call.1} parent=1 // pred_check_branch
      %31 = sbr.rel (0) target = $region13
    $region12: #{tpu_custom_call.1} parent=1 // pred_region
      _
    $region13: #{tpu_custom_call.1} parent=1 // pred_fallthru
      _
    // Predicated region
    $region14: #{tpu_custom_call.1} parent=1 // pred_check
      _
    $region15: #{tpu_custom_call.1} parent=1 // pred_check_branch
      %33 = sbr.rel (0) target = $region17
    $region16: #{tpu_custom_call.1} parent=1 // pred_region
      _
    $region17: #{tpu_custom_call.1} parent=1 // pred_fallthru
      _
    // Predicated region
    $region18: #{tpu_custom_call.1} parent=1 // pred_check
      _
    $region19: #{tpu_custom_call.1} parent=1 // pred_check_branch
      %35 = sbr.rel (0) target = $region21
    $region20: #{tpu_custom_call.1} parent=1 // pred_region
      _
    $region21: #{tpu_custom_call.1} parent=1 // pred_fallthru
      _
    // Predicated region
    $region22: #{tpu_custom_call.1} parent=1 // pred_check
      _
    $region23: #{tpu_custom_call.1} parent=1 // pred_check_branch
      %37 = sbr.rel (0) target = $region25
    $region24: #{tpu_custom_call.1} parent=1 // pred_region
      _
    $region25: #{tpu_custom_call.1} parent=1 // pred_fallthru
      _
    // Predicated region
    $region26: #{tpu_custom_call.1} parent=1 // pred_check
      _
    $region27: #{tpu_custom_call.1} parent=1 // pred_check_branch
      %39 = sbr.rel (0) target = $region29
    $region28: #{tpu_custom_call.1} parent=1 // pred_region
      _
    $region29: #{tpu_custom_call.1} parent=1 // pred_fallthru
      _
    // Predicated region
    $region30: #{tpu_custom_call.1} parent=1 // pred_check
      _
    $region31: #{tpu_custom_call.1} parent=1 // pred_check_branch
      %41 = sbr.rel (0) target = $region33
    $region32: #{tpu_custom_call.1} parent=1 // pred_region
      _
    $region33: #{tpu_custom_call.1} parent=1 // pred_fallthru
      _
    // Predicated region
    $region34: #{tpu_custom_call.1} parent=1 // pred_check
      _
    $region35: #{tpu_custom_call.1} parent=1 // pred_check_branch
      %43 = sbr.rel (0) target = $region37
    $region36: #{tpu_custom_call.1} parent=1 // pred_region
      %45 = dma.done [#allocation5], 256
    $region37: #{tpu_custom_call.1} parent=1 // pred_fallthru
      _
    %v46 = vld [vmem:[%s0] sm:$0xff]
    %v47 = vld [vmem:[%s0 + $0x8] sm:$0xff]
    %v48 = vld [vmem:[%s0 + $0x10] sm:$0xff]
    %v49 = vld [vmem:[%s0 + $0x18] sm:$0xff]
    %v50 = vld [vmem:[%s0 + $0x20] sm:$0xff]
    %v51 = vld [vmem:[%s0 + $0x28] sm:$0xff]
    %v52 = vld [vmem:[%s0 + $0x30] sm:$0xff]
    %v53 = vld [vmem:[%s0 + $0x38] sm:$0xff]
    %v54 = vld [vmem:[#allocation4] sm:$0xff]
    %v55 = vld [vmem:[#allocation4 + $0x8] sm:$0xff]
    %v56 = vld [vmem:[%s3] sm:$0x1]
    %v58 = vperm.slane %v56, 0
    %vm60 = vcmask 130048
    %v62 = vsel %vm60, %v46, 0
    %v65 = vsel %vm60, %v47, 0
    %v68 = vsel %vm60, %v48, 0
    %v71 = vsel %vm60, %v49, 0
    %v74 = vsel %vm60, %v50, 0
    %v77 = vsel %vm60, %v51, 0
    %v80 = vsel %vm60, %v52, 0
    %v83 = vsel %vm60, %v53, 0
    %85 = vmatpush.msra.mxu0 0.0
    %86 = vmatpush.msra.mxu0 0.0
    %87 = vmatpush.msra.mxu0 0.0
    %88 = vmatpush.msra.mxu0 0.0
    %89 = vmatpush.msra.mxu0 0.0
    %90 = vmatpush.msra.mxu0 0.0
    %91 = vmatpush.msra.mxu0 0.0
    %92 = vmatpush.msra.mxu0 0.0
    %93 = vmatpush.msra.mxu0 0.0
    %94 = vmatpush.msra.mxu0 0.0
    %95 = vmatpush.msra.mxu0 0.0
    %96 = vmatpush.msra.mxu0 0.0
    %97 = vmatpush.msra.mxu0 0.0
    %98 = vmatpush.msra.mxu0 0.0
    %99 = vmatpush.msra.mxu0 %v55
    %100 = vmatpush.msra.mxu0 %v54
    %101 = vmatmul.f32.gmra.mxu0 %v62
    %v102 = vpop.f32.mrf.mxu0
    %v103 = vadd.f32 %v58, %v102
    %104 = vmatmul.f32.gmra.mxu0 %v65
    %v105 = vpop.f32.mrf.mxu0
    %v106 = vadd.f32 %v58, %v105
    %107 = vmatmul.f32.gmra.mxu0 %v68
    %v108 = vpop.f32.mrf.mxu0
    %v109 = vadd.f32 %v58, %v108
    %110 = vmatmul.f32.gmra.mxu0 %v71
    %v111 = vpop.f32.mrf.mxu0
    %v112 = vadd.f32 %v58, %v111
    %113 = vmatmul.f32.gmra.mxu0 %v74
    %v114 = vpop.f32.mrf.mxu0
    %v115 = vadd.f32 %v58, %v114
    %116 = vmatmul.f32.gmra.mxu0 %v77
    %v117 = vpop.f32.mrf.mxu0
    %v118 = vadd.f32 %v58, %v117
    %119 = vmatmul.f32.gmra.mxu0 %v80
    %v120 = vpop.f32.mrf.mxu0
    %v121 = vadd.f32 %v58, %v120
    %122 = vmatmul.f32.gmra.mxu0 %v83
    %v123 = vpop.f32.mrf.mxu0
    %v124 = vadd.f32 %v58, %v123
    %125 = vdwg.mxu0
    %126 = vst [vmem:[#allocation2] sm:$0xff] %v103
    %127 = vst [vmem:[#allocation2 + $0x8] sm:$0xff] %v106
    %128 = vst [vmem:[#allocation2 + $0x10] sm:$0xff] %v109
    %129 = vst [vmem:[#allocation2 + $0x18] sm:$0xff] %v112
    %130 = vst [vmem:[#allocation2 + $0x20] sm:$0xff] %v115
    %131 = vst [vmem:[#allocation2 + $0x28] sm:$0xff] %v118
    %132 = vst [vmem:[#allocation2 + $0x30] sm:$0xff] %v121
    %133 = vst [vmem:[#allocation2 + $0x38] sm:$0xff] %v124
    %v134 = vld [vmem:[%s2] sm:$0xff]
    %v135 = vld [vmem:[%s2 + $0x8] sm:$0xff]
    %v136 = vld [vmem:[%s2 + $0x10] sm:$0xff]
    %v137 = vld [vmem:[%s2 + $0x18] sm:$0xff]
    %v138 = vld [vmem:[%s4] sm:$0xff]
    %v139 = vld [vmem:[%s4 + $0x8] sm:$0xff]
    %v140 = vld [vmem:[%s4 + $0x10] sm:$0xff]
    %v141 = vld [vmem:[%s4 + $0x18] sm:$0xff]
    %v142 = vld [vmem:[%s4 + $0x20] sm:$0xff]
    %v143 = vld [vmem:[%s4 + $0x28] sm:$0xff]
    %v144 = vld [vmem:[%s4 + $0x30] sm:$0xff]
    %v145 = vld [vmem:[%s4 + $0x38] sm:$0xff]
    %v146 = vld [vmem:[%s5] sm:$0x1]
    %v148 = vperm.slane %v146, 0
    %v150 = vld [vmem:[#allocation2] sm:$0xff]
    %v151 = vxor.u32 %v150, 2147483648
    %v152 = vmul.f32 %v151, 1.442695
    %v153 = vpow.pop %v152
    %v154 = vadd.f32 %v153, 1.0
    %v155 = vrcp.pop %v154
    %v156 = vmul.f32 %v154, %v155
    %v157 = vsub.f32 1.0, %v156
    %v158 = vmul.f32 %v155, %v157
    %v159 = vadd.f32 %v155, %v158
    %vm160 = vweird.f32 %v154
    %vm161 = vweird.f32 %v155
    %vm162 = vmor %vm160, %vm161
    %v163 = vsel %vm162, %v155, %v159
    %v164 = vand.u32 2147483647, %v154
    %vm165 = vcmp.eq.f32.partialorder %v164, 8.507059e+37
    %v166 = vand.u32 %v154, 2147483648
    %v167 = vor.u32 1.1754944e-38, %v166
    %v168 = vsel %vm165, %v167, %v163
    %v169 = vmul.f32 1.0, %v168
    %v170 = vtanh.pop %v150
    %172 = vrot.lane.b32.xlu0 %v170, 32
    %v173 = vpop.permute.xlu0 %172
    %v175 = vmul.f32 %v169, %v173
    %v176 = vtanh.pop %v175
    %178 = vrot.lane.b32.xlu0 %v176, 64
    %v179 = vpop.permute.xlu0 %178
    %v181 = vmul.f32 %v169, %v179
    %183 = vrot.lane.b32.xlu0 %v181, 64
    %v184 = vpop.permute.xlu0 %183
    %vm185 = vcmask 261120
    %v186 = vsel %vm185, %v184, 0
    %188 = vmatpush.msra.mxu0 0.0
    %189 = vmatpush.msra.mxu0 0.0
    %190 = vmatpush.msra.mxu0 0.0
    %191 = vmatpush.msra.mxu0 0.0
    %192 = vmatpush.msra.mxu0 0.0
    %193 = vmatpush.msra.mxu0 0.0
    %194 = vmatpush.msra.mxu0 0.0
    %195 = vmatpush.msra.mxu0 0.0
    %196 = vmatpush.msra.mxu0 0.0
    %197 = vmatpush.msra.mxu0 0.0
    %198 = vmatpush.msra.mxu0 0.0
    %199 = vmatpush.msra.mxu0 0.0
    %200 = vmatpush.msra.mxu0 %v141
    %201 = vmatpush.msra.mxu0 %v140
    %202 = vmatpush.msra.mxu0 %v139
    %203 = vmatpush.msra.mxu0 %v138
    %204 = vmatmul.f32.gmra.mxu0 %v186
    %v205 = vpop.f32.mrf.mxu0
    %v206 = vadd.f32 %v148, %v205
    %207 = vdwg.mxu0
    %v208 = vxor.u32 %v206, 2147483648
    %v209 = vmul.f32 %v208, 1.442695
    %v210 = vpow.pop %v209
    %v211 = vadd.f32 %v210, 1.0
    %v212 = vrcp.pop %v211
    %v213 = vmul.f32 %v211, %v212
    %v214 = vsub.f32 1.0, %v213
    %v215 = vmul.f32 %v212, %v214
    %v216 = vadd.f32 %v212, %v215
    %vm217 = vweird.f32 %v211
    %vm218 = vweird.f32 %v212
    %vm219 = vmor %vm217, %vm218
    %v220 = vsel %vm219, %v212, %v216
    %v221 = vand.u32 2147483647, %v211
    %vm222 = vcmp.eq.f32.partialorder %v221, 8.507059e+37
    %v223 = vand.u32 %v211, 2147483648
    %v224 = vor.u32 1.1754944e-38, %v223
    %v225 = vsel %vm222, %v224, %v220
    %v226 = vmul.f32 1.0, %v225
    %v227 = vtanh.pop %v206
    %229 = vrot.lane.b32.xlu0 %v227, 32
    %v230 = vpop.permute.xlu0 %229
    %v232 = vmul.f32 %v226, %v230
    %v233 = vtanh.pop %v232
    %235 = vrot.lane.b32.xlu0 %v233, 64
    %v236 = vpop.permute.xlu0 %235
    %v238 = vmul.f32 %v226, %v236
    %s239 = scalar_lea.vmem [#allocation2], 8
    %v240 = vld [vmem:[%s239] sm:$0xff]
    %241 = vmatpush.msra.mxu0 0.0
    %242 = vmatpush.msra.mxu0 0.0
    %243 = vmatpush.msra.mxu0 0.0
    %244 = vmatpush.msra.mxu0 0.0
    %245 = vmatpush.msra.mxu0 0.0
    %246 = vmatpush.msra.mxu0 0.0
    %247 = vmatpush.msra.mxu0 0.0
    %248 = vmatpush.msra.mxu0 0.0
    %249 = vmatpush.msra.mxu0 0.0
    %250 = vmatpush.msra.mxu0 0.0
    %251 = vmatpush.msra.mxu0 0.0
    %252 = vmatpush.msra.mxu0 0.0
    %253 = vmatpush.msra.mxu0 %v137
    %254 = vmatpush.msra.mxu0 %v136
    %255 = vmatpush.msra.mxu0 %v135
    %256 = vmatpush.msra.mxu0 %v134
    %257 = vmatmul.f32.gmra.mxu0 %v186
    %v258 = vpop.f32.mrf.mxu0
    %v259 = vadd.f32 0.0, %v258
    %260 = vdwg.mxu0
    %v261 = vadd.f32 %v240, %v259
    %v262 = vxor.u32 %v261, 2147483648
    %v263 = vmul.f32 %v262, 1.442695
    %v264 = vpow.pop %v263
    %v265 = vadd.f32 %v264, 1.0
    %v266 = vrcp.pop %v265
    %v267 = vmul.f32 %v265, %v266
    %v268 = vsub.f32 1.0, %v267
    %v269 = vmul.f32 %v266, %v268
    %v270 = vadd.f32 %v266, %v269
    %vm271 = vweird.f32 %v265
    %vm272 = vweird.f32 %v266
    %vm273 = vmor %vm271, %vm272
    %v274 = vsel %vm273, %v266, %v270
    %v275 = vand.u32 2147483647, %v265
    %vm276 = vcmp.eq.f32.partialorder %v275, 8.507059e+37
    %v277 = vand.u32 %v265, 2147483648
    %v278 = vor.u32 1.1754944e-38, %v277
    %v279 = vsel %vm276, %v278, %v274
    %v280 = vmul.f32 1.0, %v279
    %v281 = vtanh.pop %v261
    %283 = vrot.lane.b32.xlu0 %v175, 32
    %v284 = vpop.permute.xlu0 %283
    %v286 = vmul.f32 %v280, %v284
    %288 = vrot.lane.b32.xlu0 %v281, 32
    %v289 = vpop.permute.xlu0 %288
    %v291 = vmul.f32 %v280, %v289
    %293 = vrot.lane.b32.xlu0 %v291, 32
    %v294 = vpop.permute.xlu0 %293
    %v296 = vadd.f32 %v286, %v294
    %v297 = vtanh.pop %v296
    %299 = vrot.lane.b32.xlu0 %v297, 32
    %v300 = vpop.permute.xlu0 %299
    %v302 = vmul.f32 %v280, %v300
    %304 = vrot.lane.b32.xlu0 %v302, 64
    %v305 = vpop.permute.xlu0 %304
    %308 = vrot.lane.b32.xlu0 %v238, 96
    %v309 = vpop.permute.xlu0 %308
    %v311 = vsel %vm185, %v305, %v309
    %vm312 = vcmask 523264
    %v314 = vsel %vm312, %v311, 0
    %316 = vmatpush.msra.mxu0 0.0
    %317 = vmatpush.msra.mxu0 0.0
    %318 = vmatpush.msra.mxu0 0.0
    %319 = vmatpush.msra.mxu0 0.0
    %320 = vmatpush.msra.mxu0 0.0
    %321 = vmatpush.msra.mxu0 0.0
    %322 = vmatpush.msra.mxu0 0.0
    %323 = vmatpush.msra.mxu0 0.0
    %324 = vmatpush.msra.mxu0 %v145
    %325 = vmatpush.msra.mxu0 %v144
    %326 = vmatpush.msra.mxu0 %v143
    %327 = vmatpush.msra.mxu0 %v142
    %328 = vmatpush.msra.mxu0 %v141
    %329 = vmatpush.msra.mxu0 %v140
    %330 = vmatpush.msra.mxu0 %v139
    %331 = vmatpush.msra.mxu0 %v138
    %332 = vmatmul.f32.gmra.mxu0 %v314
    %v333 = vpop.f32.mrf.mxu0
    %v334 = vadd.f32 %v148, %v333
    %335 = vdwg.mxu0
    %v336 = vxor.u32 %v334, 2147483648
    %v337 = vmul.f32 %v336, 1.442695
    %v338 = vpow.pop %v337
    %v339 = vadd.f32 %v338, 1.0
    %v340 = vrcp.pop %v339
    %v341 = vmul.f32 %v339, %v340
    %v342 = vsub.f32 1.0, %v341
    %v343 = vmul.f32 %v340, %v342
    %v344 = vadd.f32 %v340, %v343
    %vm345 = vweird.f32 %v339
    %vm346 = vweird.f32 %v340
    %vm347 = vmor %vm345, %vm346
    %v348 = vsel %vm347, %v340, %v344
    %v349 = vand.u32 2147483647, %v339
    %vm350 = vcmp.eq.f32.partialorder %v349, 8.507059e+37
    %v351 = vand.u32 %v339, 2147483648
    %v352 = vor.u32 1.1754944e-38, %v351
    %v353 = vsel %vm350, %v352, %v348
    %v354 = vmul.f32 1.0, %v353
    %v355 = vtanh.pop %v334
    %357 = vrot.lane.b32.xlu0 %v232, 32
    %v358 = vpop.permute.xlu0 %357
    %v360 = vmul.f32 %v354, %v358
    %362 = vrot.lane.b32.xlu0 %v355, 32
    %v363 = vpop.permute.xlu0 %362
    %v365 = vmul.f32 %v354, %v363
    %367 = vrot.lane.b32.xlu0 %v365, 32
    %v368 = vpop.permute.xlu0 %367
    %v370 = vadd.f32 %v360, %v368
    %v371 = vtanh.pop %v370
    %373 = vrot.lane.b32.xlu0 %v371, 32
    %v374 = vpop.permute.xlu0 %373
    %v376 = vmul.f32 %v354, %v374
    %s377 = scalar_lea.vmem [#allocation2], 16
    %v378 = vld [vmem:[%s377] sm:$0xff]
    %v379 = vsel %vm185, %v305, 0
    %381 = vmatpush.msra.mxu0 0.0
    %382 = vmatpush.msra.mxu0 0.0
    %383 = vmatpush.msra.mxu0 0.0
    %384 = vmatpush.msra.mxu0 0.0
    %385 = vmatpush.msra.mxu0 0.0
    %386 = vmatpush.msra.mxu0 0.0
    %387 = vmatpush.msra.mxu0 0.0
    %388 = vmatpush.msra.mxu0 0.0
    %389 = vmatpush.msra.mxu0 0.0
    %390 = vmatpush.msra.mxu0 0.0
    %391 = vmatpush.msra.mxu0 0.0
    %392 = vmatpush.msra.mxu0 0.0
    %393 = vmatpush.msra.mxu0 %v137
    %394 = vmatpush.msra.mxu0 %v136
    %395 = vmatpush.msra.mxu0 %v135
    %396 = vmatpush.msra.mxu0 %v134
    %397 = vmatmul.f32.gmra.mxu0 %v379
    %v398 = vpop.f32.mrf.mxu0
    %v399 = vadd.f32 0.0, %v398
    %400 = vdwg.mxu0
    %v401 = vadd.f32 %v378, %v399
    %v402 = vxor.u32 %v401, 2147483648
    %v403 = vmul.f32 %v402, 1.442695
    %v404 = vpow.pop %v403
    %v405 = vadd.f32 %v404, 1.0
    %v406 = vrcp.pop %v405
    %v407 = vmul.f32 %v405, %v406
    %v408 = vsub.f32 1.0, %v407
    %v409 = vmul.f32 %v406, %v408
    %v410 = vadd.f32 %v406, %v409
    %vm411 = vweird.f32 %v405
    %vm412 = vweird.f32 %v406
    %vm413 = vmor %vm411, %vm412
    %v414 = vsel %vm413, %v406, %v410
    %v415 = vand.u32 2147483647, %v405
    %vm416 = vcmp.eq.f32.partialorder %v415, 8.507059e+37
    %v417 = vand.u32 %v405, 2147483648
    %v418 = vor.u32 1.1754944e-38, %v417
    %v419 = vsel %vm416, %v418, %v414
    %v420 = vmul.f32 1.0, %v419
    %v421 = vtanh.pop %v401
    %v422 = vmul.f32 %v420, %v296
    %424 = vrot.lane.b32.xlu0 %v421, 32
    %v425 = vpop.permute.xlu0 %424
    %v427 = vmul.f32 %v420, %v425
    %429 = vrot.lane.b32.xlu0 %v427, 32
    %v430 = vpop.permute.xlu0 %429
    %v432 = vadd.f32 %v422, %v430
    %v433 = vtanh.pop %v432
    %435 = vrot.lane.b32.xlu0 %v433, 32
    %v436 = vpop.permute.xlu0 %435
    %v438 = vmul.f32 %v420, %v436
    %440 = vrot.lane.b32.xlu0 %v438, 64
    %v441 = vpop.permute.xlu0 %440
    %444 = vrot.lane.b32.xlu0 %v376, 96
    %v445 = vpop.permute.xlu0 %444
    %v447 = vsel %vm185, %v441, %v445
    %v449 = vsel %vm312, %v447, 0
    %451 = vmatpush.msra.mxu0 0.0
    %452 = vmatpush.msra.mxu0 0.0
    %453 = vmatpush.msra.mxu0 0.0
    %454 = vmatpush.msra.mxu0 0.0
    %455 = vmatpush.msra.mxu0 0.0
    %456 = vmatpush.msra.mxu0 0.0
    %457 = vmatpush.msra.mxu0 0.0
    %458 = vmatpush.msra.mxu0 0.0
    %459 = vmatpush.msra.mxu0 %v145
    %460 = vmatpush.msra.mxu0 %v144
    %461 = vmatpush.msra.mxu0 %v143
    %462 = vmatpush.msra.mxu0 %v142
    %463 = vmatpush.msra.mxu0 %v141
    %464 = vmatpush.msra.mxu0 %v140
    %465 = vmatpush.msra.mxu0 %v139
    %466 = vmatpush.msra.mxu0 %v138
    %467 = vmatmul.f32.gmra.mxu0 %v449
    %v468 = vpop.f32.mrf.mxu0
    %v469 = vadd.f32 %v148, %v468
    %470 = vdwg.mxu0
    %v471 = vxor.u32 %v469, 2147483648
    %v472 = vmul.f32 %v471, 1.442695
    %v473 = vpow.pop %v472
    %v474 = vadd.f32 %v473, 1.0
    %v475 = vrcp.pop %v474
    %v476 = vmul.f32 %v474, %v475
    %v477 = vsub.f32 1.0, %v476
    %v478 = vmul.f32 %v475, %v477
    %v479 = vadd.f32 %v475, %v478
    %vm480 = vweird.f32 %v474
    %vm481 = vweird.f32 %v475
    %vm482 = vmor %vm480, %vm481
    %v483 = vsel %vm482, %v475, %v479
    %v484 = vand.u32 2147483647, %v474
    %vm485 = vcmp.eq.f32.partialorder %v484, 8.507059e+37
    %v486 = vand.u32 %v474, 2147483648
    %v487 = vor.u32 1.1754944e-38, %v486
    %v488 = vsel %vm485, %v487, %v483
    %v489 = vmul.f32 1.0, %v488
    %v490 = vtanh.pop %v469
    %v491 = vmul.f32 %v489, %v370
    %493 = vrot.lane.b32.xlu0 %v490, 32
    %v494 = vpop.permute.xlu0 %493
    %v496 = vmul.f32 %v489, %v494
    %498 = vrot.lane.b32.xlu0 %v496, 32
    %v499 = vpop.permute.xlu0 %498
    %v501 = vadd.f32 %v491, %v499
    %v502 = vtanh.pop %v501
    %504 = vrot.lane.b32.xlu0 %v502, 32
    %v505 = vpop.permute.xlu0 %504
    %v507 = vmul.f32 %v489, %v505
    %s508 = scalar_lea.vmem [#allocation2], 24
    %v509 = vld [vmem:[%s508] sm:$0xff]
    %v510 = vsel %vm185, %v441, 0
    %512 = vmatpush.msra.mxu0 0.0
    %513 = vmatpush.msra.mxu0 0.0
    %514 = vmatpush.msra.mxu0 0.0
    %515 = vmatpush.msra.mxu0 0.0
    %516 = vmatpush.msra.mxu0 0.0
    %517 = vmatpush.msra.mxu0 0.0
    %518 = vmatpush.msra.mxu0 0.0
    %519 = vmatpush.msra.mxu0 0.0
    %520 = vmatpush.msra.mxu0 0.0
    %521 = vmatpush.msra.mxu0 0.0
    %522 = vmatpush.msra.mxu0 0.0
    %523 = vmatpush.msra.mxu0 0.0
    %524 = vmatpush.msra.mxu0 %v137
    %525 = vmatpush.msra.mxu0 %v136
    %526 = vmatpush.msra.mxu0 %v135
    %527 = vmatpush.msra.mxu0 %v134
    %528 = vmatmul.f32.gmra.mxu0 %v510
    %v529 = vpop.f32.mrf.mxu0
    %v530 = vadd.f32 0.0, %v529
    %531 = vdwg.mxu0
    %v532 = vadd.f32 %v509, %v530
    %v533 = vxor.u32 %v532, 2147483648
    %v534 = vmul.f32 %v533, 1.442695
    %v535 = vpow.pop %v534
    %v536 = vadd.f32 %v535, 1.0
    %v537 = vrcp.pop %v536
    %v538 = vmul.f32 %v536, %v537
    %v539 = vsub.f32 1.0, %v538
    %v540 = vmul.f32 %v537, %v539
    %v541 = vadd.f32 %v537, %v540
    %vm542 = vweird.f32 %v536
    %vm543 = vweird.f32 %v537
    %vm544 = vmor %vm542, %vm543
    %v545 = vsel %vm544, %v537, %v541
    %v546 = vand.u32 2147483647, %v536
    %vm547 = vcmp.eq.f32.partialorder %v546, 8.507059e+37
    %v548 = vand.u32 %v536, 2147483648
    %v549 = vor.u32 1.1754944e-38, %v548
    %v550 = vsel %vm547, %v549, %v545
    %v551 = vmul.f32 1.0, %v550
    %v552 = vtanh.pop %v532
    %v553 = vmul.f32 %v551, %v432
    %555 = vrot.lane.b32.xlu0 %v552, 32
    %v556 = vpop.permute.xlu0 %555
    %v558 = vmul.f32 %v551, %v556
    %560 = vrot.lane.b32.xlu0 %v558, 32
    %v561 = vpop.permute.xlu0 %560
    %v563 = vadd.f32 %v553, %v561
    %v564 = vtanh.pop %v563
    %566 = vrot.lane.b32.xlu0 %v564, 32
    %v567 = vpop.permute.xlu0 %566
    %v569 = vmul.f32 %v551, %v567
    %571 = vrot.lane.b32.xlu0 %v569, 64
    %v572 = vpop.permute.xlu0 %571
    %575 = vrot.lane.b32.xlu0 %v507, 96
    %v576 = vpop.permute.xlu0 %575
    %v578 = vsel %vm185, %v572, %v576
    %v580 = vsel %vm312, %v578, 0
    %582 = vmatpush.msra.mxu0 0.0
    %583 = vmatpush.msra.mxu0 0.0
    %584 = vmatpush.msra.mxu0 0.0
    %585 = vmatpush.msra.mxu0 0.0
    %586 = vmatpush.msra.mxu0 0.0
    %587 = vmatpush.msra.mxu0 0.0
    %588 = vmatpush.msra.mxu0 0.0
    %589 = vmatpush.msra.mxu0 0.0
    %590 = vmatpush.msra.mxu0 %v145
    %591 = vmatpush.msra.mxu0 %v144
    %592 = vmatpush.msra.mxu0 %v143
    %593 = vmatpush.msra.mxu0 %v142
    %594 = vmatpush.msra.mxu0 %v141
    %595 = vmatpush.msra.mxu0 %v140
    %596 = vmatpush.msra.mxu0 %v139
    %597 = vmatpush.msra.mxu0 %v138
    %598 = vmatmul.f32.gmra.mxu0 %v580
    %v599 = vpop.f32.mrf.mxu0
    %v600 = vadd.f32 %v148, %v599
    %601 = vdwg.mxu0
    %v602 = vxor.u32 %v600, 2147483648
    %v603 = vmul.f32 %v602, 1.442695
    %v604 = vpow.pop %v603
    %v605 = vadd.f32 %v604, 1.0
    %v606 = vrcp.pop %v605
    %v607 = vmul.f32 %v605, %v606
    %v608 = vsub.f32 1.0, %v607
    %v609 = vmul.f32 %v606, %v608
    %v610 = vadd.f32 %v606, %v609
    %vm611 = vweird.f32 %v605
    %vm612 = vweird.f32 %v606
    %vm613 = vmor %vm611, %vm612
    %v614 = vsel %vm613, %v606, %v610
    %v615 = vand.u32 2147483647, %v605
    %vm616 = vcmp.eq.f32.partialorder %v615, 8.507059e+37
    %v617 = vand.u32 %v605, 2147483648
    %v618 = vor.u32 1.1754944e-38, %v617
    %v619 = vsel %vm616, %v618, %v614
    %v620 = vmul.f32 1.0, %v619
    %v621 = vtanh.pop %v600
    %v622 = vmul.f32 %v620, %v501
    %624 = vrot.lane.b32.xlu0 %v621, 32
    %v625 = vpop.permute.xlu0 %624
    %v627 = vmul.f32 %v620, %v625
    %629 = vrot.lane.b32.xlu0 %v627, 32
    %v630 = vpop.permute.xlu0 %629
    %v632 = vadd.f32 %v622, %v630
    %v633 = vtanh.pop %v632
    %635 = vrot.lane.b32.xlu0 %v633, 32
    %v636 = vpop.permute.xlu0 %635
    %v638 = vmul.f32 %v620, %v636
    %s639 = scalar_lea.vmem [#allocation2], 32
    %v640 = vld [vmem:[%s639] sm:$0xff]
    %v641 = vsel %vm185, %v572, 0
    %643 = vmatpush.msra.mxu0 0.0
    %644 = vmatpush.msra.mxu0 0.0
    %645 = vmatpush.msra.mxu0 0.0
    %646 = vmatpush.msra.mxu0 0.0
    %647 = vmatpush.msra.mxu0 0.0
    %648 = vmatpush.msra.mxu0 0.0
    %649 = vmatpush.msra.mxu0 0.0
    %650 = vmatpush.msra.mxu0 0.0
    %651 = vmatpush.msra.mxu0 0.0
    %652 = vmatpush.msra.mxu0 0.0
    %653 = vmatpush.msra.mxu0 0.0
    %654 = vmatpush.msra.mxu0 0.0
    %655 = vmatpush.msra.mxu0 %v137
    %656 = vmatpush.msra.mxu0 %v136
    %657 = vmatpush.msra.mxu0 %v135
    %658 = vmatpush.msra.mxu0 %v134
    %659 = vmatmul.f32.gmra.mxu0 %v641
    %v660 = vpop.f32.mrf.mxu0
    %v661 = vadd.f32 0.0, %v660
    %662 = vdwg.mxu0
    %v663 = vadd.f32 %v640, %v661
    %v664 = vxor.u32 %v663, 2147483648
    %v665 = vmul.f32 %v664, 1.442695
    %v666 = vpow.pop %v665
    %v667 = vadd.f32 %v666, 1.0
    %v668 = vrcp.pop %v667
    %v669 = vmul.f32 %v667, %v668
    %v670 = vsub.f32 1.0, %v669
    %v671 = vmul.f32 %v668, %v670
    %v672 = vadd.f32 %v668, %v671
    %vm673 = vweird.f32 %v667
    %vm674 = vweird.f32 %v668
    %vm675 = vmor %vm673, %vm674
    %v676 = vsel %vm675, %v668, %v672
    %v677 = vand.u32 2147483647, %v667
    %vm678 = vcmp.eq.f32.partialorder %v677, 8.507059e+37
    %v679 = vand.u32 %v667, 2147483648
    %v680 = vor.u32 1.1754944e-38, %v679
    %v681 = vsel %vm678, %v680, %v676
    %v682 = vmul.f32 1.0, %v681
    %v683 = vtanh.pop %v663
    %v684 = vmul.f32 %v682, %v563
    %686 = vrot.lane.b32.xlu0 %v683, 32
    %v687 = vpop.permute.xlu0 %686
    %v689 = vmul.f32 %v682, %v687
    %691 = vrot.lane.b32.xlu0 %v689, 32
    %v692 = vpop.permute.xlu0 %691
    %v694 = vadd.f32 %v684, %v692
    %v695 = vtanh.pop %v694
    %697 = vrot.lane.b32.xlu0 %v695, 32
    %v698 = vpop.permute.xlu0 %697
    %v700 = vmul.f32 %v682, %v698
    %702 = vrot.lane.b32.xlu0 %v700, 64
    %v703 = vpop.permute.xlu0 %702
    %706 = vrot.lane.b32.xlu0 %v638, 96
    %v707 = vpop.permute.xlu0 %706
    %v709 = vsel %vm185, %v703, %v707
    %v711 = vsel %vm312, %v709, 0
    %713 = vmatpush.msra.mxu0 0.0
    %714 = vmatpush.msra.mxu0 0.0
    %715 = vmatpush.msra.mxu0 0.0
    %716 = vmatpush.msra.mxu0 0.0
    %717 = vmatpush.msra.mxu0 0.0
    %718 = vmatpush.msra.mxu0 0.0
    %719 = vmatpush.msra.mxu0 0.0
    %720 = vmatpush.msra.mxu0 0.0
    %721 = vmatpush.msra.mxu0 %v145
    %722 = vmatpush.msra.mxu0 %v144
    %723 = vmatpush.msra.mxu0 %v143
    %724 = vmatpush.msra.mxu0 %v142
    %725 = vmatpush.msra.mxu0 %v141
    %726 = vmatpush.msra.mxu0 %v140
    %727 = vmatpush.msra.mxu0 %v139
    %728 = vmatpush.msra.mxu0 %v138
    %729 = vmatmul.f32.gmra.mxu0 %v711
    %v730 = vpop.f32.mrf.mxu0
    %v731 = vadd.f32 %v148, %v730
    %732 = vdwg.mxu0
    %v733 = vxor.u32 %v731, 2147483648
    %v734 = vmul.f32 %v733, 1.442695
    %v735 = vpow.pop %v734
    %v736 = vadd.f32 %v735, 1.0
    %v737 = vrcp.pop %v736
    %v738 = vmul.f32 %v736, %v737
    %v739 = vsub.f32 1.0, %v738
    %v740 = vmul.f32 %v737, %v739
    %v741 = vadd.f32 %v737, %v740
    %vm742 = vweird.f32 %v736
    %vm743 = vweird.f32 %v737
    %vm744 = vmor %vm742, %vm743
    %v745 = vsel %vm744, %v737, %v741
    %v746 = vand.u32 2147483647, %v736
    %vm747 = vcmp.eq.f32.partialorder %v746, 8.507059e+37
    %v748 = vand.u32 %v736, 2147483648
    %v749 = vor.u32 1.1754944e-38, %v748
    %v750 = vsel %vm747, %v749, %v745
    %v751 = vmul.f32 1.0, %v750
    %v752 = vtanh.pop %v731
    %v753 = vmul.f32 %v751, %v632
    %755 = vrot.lane.b32.xlu0 %v752, 32
    %v756 = vpop.permute.xlu0 %755
    %v758 = vmul.f32 %v751, %v756
    %760 = vrot.lane.b32.xlu0 %v758, 32
    %v761 = vpop.permute.xlu0 %760
    %v763 = vadd.f32 %v753, %v761
    %v764 = vtanh.pop %v763
    %766 = vrot.lane.b32.xlu0 %v764, 32
    %v767 = vpop.permute.xlu0 %766
    %v769 = vmul.f32 %v751, %v767
    %s770 = scalar_lea.vmem [#allocation2], 40
    %v771 = vld [vmem:[%s770] sm:$0xff]
    %v772 = vsel %vm185, %v703, 0
    %774 = vmatpush.msra.mxu0 0.0
    %775 = vmatpush.msra.mxu0 0.0
    %776 = vmatpush.msra.mxu0 0.0
    %777 = vmatpush.msra.mxu0 0.0
    %778 = vmatpush.msra.mxu0 0.0
    %779 = vmatpush.msra.mxu0 0.0
    %780 = vmatpush.msra.mxu0 0.0
    %781 = vmatpush.msra.mxu0 0.0
    %782 = vmatpush.msra.mxu0 0.0
    %783 = vmatpush.msra.mxu0 0.0
    %784 = vmatpush.msra.mxu0 0.0
    %785 = vmatpush.msra.mxu0 0.0
    %786 = vmatpush.msra.mxu0 %v137
    %787 = vmatpush.msra.mxu0 %v136
    %788 = vmatpush.msra.mxu0 %v135
    %789 = vmatpush.msra.mxu0 %v134
    %790 = vmatmul.f32.gmra.mxu0 %v772
    %v791 = vpop.f32.mrf.mxu0
    %v792 = vadd.f32 0.0, %v791
    %793 = vdwg.mxu0
    %v794 = vadd.f32 %v771, %v792
    %v795 = vxor.u32 %v794, 2147483648
    %v796 = vmul.f32 %v795, 1.442695
    %v797 = vpow.pop %v796
    %v798 = vadd.f32 %v797, 1.0
    %v799 = vrcp.pop %v798
    %v800 = vmul.f32 %v798, %v799
    %v801 = vsub.f32 1.0, %v800
    %v802 = vmul.f32 %v799, %v801
    %v803 = vadd.f32 %v799, %v802
    %vm804 = vweird.f32 %v798
    %vm805 = vweird.f32 %v799
    %vm806 = vmor %vm804, %vm805
    %v807 = vsel %vm806, %v799, %v803
    %v808 = vand.u32 2147483647, %v798
    %vm809 = vcmp.eq.f32.partialorder %v808, 8.507059e+37
    %v810 = vand.u32 %v798, 2147483648
    %v811 = vor.u32 1.1754944e-38, %v810
    %v812 = vsel %vm809, %v811, %v807
    %v813 = vmul.f32 1.0, %v812
    %v814 = vtanh.pop %v794
    %v815 = vmul.f32 %v813, %v694
    %817 = vrot.lane.b32.xlu0 %v814, 32
    %v818 = vpop.permute.xlu0 %817
    %v820 = vmul.f32 %v813, %v818
    %822 = vrot.lane.b32.xlu0 %v820, 32
    %v823 = vpop.permute.xlu0 %822
    %v825 = vadd.f32 %v815, %v823
    %v826 = vtanh.pop %v825
    %828 = vrot.lane.b32.xlu0 %v826, 32
    %v829 = vpop.permute.xlu0 %828
    %v831 = vmul.f32 %v813, %v829
    %833 = vrot.lane.b32.xlu0 %v831, 64
    %v834 = vpop.permute.xlu0 %833
    %837 = vrot.lane.b32.xlu0 %v769, 96
    %v838 = vpop.permute.xlu0 %837
    %v840 = vsel %vm185, %v834, %v838
    %v842 = vsel %vm312, %v840, 0
    %844 = vmatpush.msra.mxu0 0.0
    %845 = vmatpush.msra.mxu0 0.0
    %846 = vmatpush.msra.mxu0 0.0
    %847 = vmatpush.msra.mxu0 0.0
    %848 = vmatpush.msra.mxu0 0.0
    %849 = vmatpush.msra.mxu0 0.0
    %850 = vmatpush.msra.mxu0 0.0
    %851 = vmatpush.msra.mxu0 0.0
    %852 = vmatpush.msra.mxu0 %v145
    %853 = vmatpush.msra.mxu0 %v144
    %854 = vmatpush.msra.mxu0 %v143
    %855 = vmatpush.msra.mxu0 %v142
    %856 = vmatpush.msra.mxu0 %v141
    %857 = vmatpush.msra.mxu0 %v140
    %858 = vmatpush.msra.mxu0 %v139
    %859 = vmatpush.msra.mxu0 %v138
    %860 = vmatmul.f32.gmra.mxu0 %v842
    %v861 = vpop.f32.mrf.mxu0
    %v862 = vadd.f32 %v148, %v861
    %863 = vdwg.mxu0
    %v864 = vxor.u32 %v862, 2147483648
    %v865 = vmul.f32 %v864, 1.442695
    %v866 = vpow.pop %v865
    %v867 = vadd.f32 %v866, 1.0
    %v868 = vrcp.pop %v867
    %v869 = vmul.f32 %v867, %v868
    %v870 = vsub.f32 1.0, %v869
    %v871 = vmul.f32 %v868, %v870
    %v872 = vadd.f32 %v868, %v871
    %vm873 = vweird.f32 %v867
    %vm874 = vweird.f32 %v868
    %vm875 = vmor %vm873, %vm874
    %v876 = vsel %vm875, %v868, %v872
    %v877 = vand.u32 2147483647, %v867
    %vm878 = vcmp.eq.f32.partialorder %v877, 8.507059e+37
    %v879 = vand.u32 %v867, 2147483648
    %v880 = vor.u32 1.1754944e-38, %v879
    %v881 = vsel %vm878, %v880, %v876
    %v882 = vmul.f32 1.0, %v881
    %v883 = vtanh.pop %v862
    %v884 = vmul.f32 %v882, %v763
    %886 = vrot.lane.b32.xlu0 %v883, 32
    %v887 = vpop.permute.xlu0 %886
    %v889 = vmul.f32 %v882, %v887
    %891 = vrot.lane.b32.xlu0 %v889, 32
    %v892 = vpop.permute.xlu0 %891
    %v894 = vadd.f32 %v884, %v892
    %v895 = vtanh.pop %v894
    %897 = vrot.lane.b32.xlu0 %v895, 32
    %v898 = vpop.permute.xlu0 %897
    %v900 = vmul.f32 %v882, %v898
    %s901 = scalar_lea.vmem [#allocation2], 48
    %v902 = vld [vmem:[%s901] sm:$0xff]
    %v903 = vsel %vm185, %v834, 0
    %905 = vmatpush.msra.mxu0 0.0
    %906 = vmatpush.msra.mxu0 0.0
    %907 = vmatpush.msra.mxu0 0.0
    %908 = vmatpush.msra.mxu0 0.0
    %909 = vmatpush.msra.mxu0 0.0
    %910 = vmatpush.msra.mxu0 0.0
    %911 = vmatpush.msra.mxu0 0.0
    %912 = vmatpush.msra.mxu0 0.0
    %913 = vmatpush.msra.mxu0 0.0
    %914 = vmatpush.msra.mxu0 0.0
    %915 = vmatpush.msra.mxu0 0.0
    %916 = vmatpush.msra.mxu0 0.0
    %917 = vmatpush.msra.mxu0 %v137
    %918 = vmatpush.msra.mxu0 %v136
    %919 = vmatpush.msra.mxu0 %v135
    %920 = vmatpush.msra.mxu0 %v134
    %921 = vmatmul.f32.gmra.mxu0 %v903
    %v922 = vpop.f32.mrf.mxu0
    %v923 = vadd.f32 0.0, %v922
    %924 = vdwg.mxu0
    %v925 = vadd.f32 %v902, %v923
    %v926 = vxor.u32 %v925, 2147483648
    %v927 = vmul.f32 %v926, 1.442695
    %v928 = vpow.pop %v927
    %v929 = vadd.f32 %v928, 1.0
    %v930 = vrcp.pop %v929
    %v931 = vmul.f32 %v929, %v930
    %v932 = vsub.f32 1.0, %v931
    %v933 = vmul.f32 %v930, %v932
    %v934 = vadd.f32 %v930, %v933
    %vm935 = vweird.f32 %v929
    %vm936 = vweird.f32 %v930
    %vm937 = vmor %vm935, %vm936
    %v938 = vsel %vm937, %v930, %v934
    %v939 = vand.u32 2147483647, %v929
    %vm940 = vcmp.eq.f32.partialorder %v939, 8.507059e+37
    %v941 = vand.u32 %v929, 2147483648
    %v942 = vor.u32 1.1754944e-38, %v941
    %v943 = vsel %vm940, %v942, %v938
    %v944 = vmul.f32 1.0, %v943
    %v945 = vtanh.pop %v925
    %v946 = vmul.f32 %v944, %v825
    %948 = vrot.lane.b32.xlu0 %v945, 32
    %v949 = vpop.permute.xlu0 %948
    %v951 = vmul.f32 %v944, %v949
    %953 = vrot.lane.b32.xlu0 %v951, 32
    %v954 = vpop.permute.xlu0 %953
    %v956 = vadd.f32 %v946, %v954
    %v957 = vtanh.pop %v956
    %959 = vrot.lane.b32.xlu0 %v957, 32
    %v960 = vpop.permute.xlu0 %959
    %v962 = vmul.f32 %v944, %v960
    %964 = vrot.lane.b32.xlu0 %v962, 64
    %v965 = vpop.permute.xlu0 %964
    %968 = vrot.lane.b32.xlu0 %v900, 96
    %v969 = vpop.permute.xlu0 %968
    %v971 = vsel %vm185, %v965, %v969
    %v973 = vsel %vm312, %v971, 0
    %975 = vmatpush.msra.mxu0 0.0
    %976 = vmatpush.msra.mxu0 0.0
    %977 = vmatpush.msra.mxu0 0.0
    %978 = vmatpush.msra.mxu0 0.0
    %979 = vmatpush.msra.mxu0 0.0
    %980 = vmatpush.msra.mxu0 0.0
    %981 = vmatpush.msra.mxu0 0.0
    %982 = vmatpush.msra.mxu0 0.0
    %983 = vmatpush.msra.mxu0 %v145
    %984 = vmatpush.msra.mxu0 %v144
    %985 = vmatpush.msra.mxu0 %v143
    %986 = vmatpush.msra.mxu0 %v142
    %987 = vmatpush.msra.mxu0 %v141
    %988 = vmatpush.msra.mxu0 %v140
    %989 = vmatpush.msra.mxu0 %v139
    %990 = vmatpush.msra.mxu0 %v138
    %991 = vmatmul.f32.gmra.mxu0 %v973
    %v992 = vpop.f32.mrf.mxu0
    %v993 = vadd.f32 %v148, %v992
    %994 = vdwg.mxu0
    %v995 = vxor.u32 %v993, 2147483648
    %v996 = vmul.f32 %v995, 1.442695
    %v997 = vpow.pop %v996
    %v998 = vadd.f32 %v997, 1.0
    %v999 = vrcp.pop %v998
    %v1000 = vmul.f32 %v998, %v999
    %v1001 = vsub.f32 1.0, %v1000
    %v1002 = vmul.f32 %v999, %v1001
    %v1003 = vadd.f32 %v999, %v1002
    %vm1004 = vweird.f32 %v998
    %vm1005 = vweird.f32 %v999
    %vm1006 = vmor %vm1004, %vm1005
    %v1007 = vsel %vm1006, %v999, %v1003
    %v1008 = vand.u32 2147483647, %v998
    %vm1009 = vcmp.eq.f32.partialorder %v1008, 8.507059e+37
    %v1010 = vand.u32 %v998, 2147483648
    %v1011 = vor.u32 1.1754944e-38, %v1010
    %v1012 = vsel %vm1009, %v1011, %v1007
    %v1013 = vmul.f32 1.0, %v1012
    %v1014 = vtanh.pop %v993
    %v1015 = vmul.f32 %v1013, %v894
    %1017 = vrot.lane.b32.xlu0 %v1014, 32
    %v1018 = vpop.permute.xlu0 %1017
    %v1020 = vmul.f32 %v1013, %v1018
    %1022 = vrot.lane.b32.xlu0 %v1020, 32
    %v1023 = vpop.permute.xlu0 %1022
    %v1025 = vadd.f32 %v1015, %v1023
    %v1026 = vtanh.pop %v1025
    %1028 = vrot.lane.b32.xlu0 %v1026, 32
    %v1029 = vpop.permute.xlu0 %1028
    %v1031 = vmul.f32 %v1013, %v1029
    %s1032 = scalar_lea.vmem [#allocation2], 56
    %v1033 = vld [vmem:[%s1032] sm:$0xff]
    %v1034 = vsel %vm185, %v965, 0
    %1036 = vmatpush.msra.mxu0 0.0
    %1037 = vmatpush.msra.mxu0 0.0
    %1038 = vmatpush.msra.mxu0 0.0
    %1039 = vmatpush.msra.mxu0 0.0
    %1040 = vmatpush.msra.mxu0 0.0
    %1041 = vmatpush.msra.mxu0 0.0
    %1042 = vmatpush.msra.mxu0 0.0
    %1043 = vmatpush.msra.mxu0 0.0
    %1044 = vmatpush.msra.mxu0 0.0
    %1045 = vmatpush.msra.mxu0 0.0
    %1046 = vmatpush.msra.mxu0 0.0
    %1047 = vmatpush.msra.mxu0 0.0
    %1048 = vmatpush.msra.mxu0 %v137
    %1049 = vmatpush.msra.mxu0 %v136
    %1050 = vmatpush.msra.mxu0 %v135
    %1051 = vmatpush.msra.mxu0 %v134
    %1052 = vmatmul.f32.gmra.mxu0 %v1034
    %v1053 = vpop.f32.mrf.mxu0
    %v1054 = vadd.f32 0.0, %v1053
    %1055 = vdwg.mxu0
    %v1056 = vadd.f32 %v1033, %v1054
    %v1057 = vxor.u32 %v1056, 2147483648
    %v1058 = vmul.f32 %v1057, 1.442695
    %v1059 = vpow.pop %v1058
    %v1060 = vadd.f32 %v1059, 1.0
    %v1061 = vrcp.pop %v1060
    %v1062 = vmul.f32 %v1060, %v1061
    %v1063 = vsub.f32 1.0, %v1062
    %v1064 = vmul.f32 %v1061, %v1063
    %v1065 = vadd.f32 %v1061, %v1064
    %vm1066 = vweird.f32 %v1060
    %vm1067 = vweird.f32 %v1061
    %vm1068 = vmor %vm1066, %vm1067
    %v1069 = vsel %vm1068, %v1061, %v1065
    %v1070 = vand.u32 2147483647, %v1060
    %vm1071 = vcmp.eq.f32.partialorder %v1070, 8.507059e+37
    %v1072 = vand.u32 %v1060, 2147483648
    %v1073 = vor.u32 1.1754944e-38, %v1072
    %v1074 = vsel %vm1071, %v1073, %v1069
    %v1075 = vmul.f32 1.0, %v1074
    %v1076 = vtanh.pop %v1056
    %v1077 = vmul.f32 %v1075, %v956
    %1079 = vrot.lane.b32.xlu0 %v1076, 32
    %v1080 = vpop.permute.xlu0 %1079
    %v1082 = vmul.f32 %v1075, %v1080
    %1084 = vrot.lane.b32.xlu0 %v1082, 32
    %v1085 = vpop.permute.xlu0 %1084
    %v1087 = vadd.f32 %v1077, %v1085
    %v1088 = vtanh.pop %v1087
    %1090 = vrot.lane.b32.xlu0 %v1088, 32
    %v1091 = vpop.permute.xlu0 %1090
    %v1093 = vmul.f32 %v1075, %v1091
    %1095 = vrot.lane.b32.xlu0 %v1093, 64
    %v1096 = vpop.permute.xlu0 %1095
    %1099 = vrot.lane.b32.xlu0 %v1031, 96
    %v1100 = vpop.permute.xlu0 %1099
    %v1102 = vsel %vm185, %v1096, %v1100
    %v1104 = vsel %vm312, %v1102, 0
    %1106 = vmatpush.msra.mxu0 0.0
    %1107 = vmatpush.msra.mxu0 0.0
    %1108 = vmatpush.msra.mxu0 0.0
    %1109 = vmatpush.msra.mxu0 0.0
    %1110 = vmatpush.msra.mxu0 0.0
    %1111 = vmatpush.msra.mxu0 0.0
    %1112 = vmatpush.msra.mxu0 0.0
    %1113 = vmatpush.msra.mxu0 0.0
    %1114 = vmatpush.msra.mxu0 %v145
    %1115 = vmatpush.msra.mxu0 %v144
    %1116 = vmatpush.msra.mxu0 %v143
    %1117 = vmatpush.msra.mxu0 %v142
    %1118 = vmatpush.msra.mxu0 %v141
    %1119 = vmatpush.msra.mxu0 %v140
    %1120 = vmatpush.msra.mxu0 %v139
    %1121 = vmatpush.msra.mxu0 %v138
    %1122 = vmatmul.f32.gmra.mxu0 %v1104
    %v1123 = vpop.f32.mrf.mxu0
    %v1124 = vadd.f32 %v148, %v1123
    %1125 = vdwg.mxu0
    %v1126 = vxor.u32 %v1124, 2147483648
    %v1127 = vmul.f32 %v1126, 1.442695
    %v1128 = vpow.pop %v1127
    %v1129 = vadd.f32 %v1128, 1.0
    %v1130 = vrcp.pop %v1129
    %v1131 = vmul.f32 %v1129, %v1130
    %v1132 = vsub.f32 1.0, %v1131
    %v1133 = vmul.f32 %v1130, %v1132
    %v1134 = vadd.f32 %v1130, %v1133
    %vm1135 = vweird.f32 %v1129
    %vm1136 = vweird.f32 %v1130
    %vm1137 = vmor %vm1135, %vm1136
    %v1138 = vsel %vm1137, %v1130, %v1134
    %v1139 = vand.u32 2147483647, %v1129
    %vm1140 = vcmp.eq.f32.partialorder %v1139, 8.507059e+37
    %v1141 = vand.u32 %v1129, 2147483648
    %v1142 = vor.u32 1.1754944e-38, %v1141
    %v1143 = vsel %vm1140, %v1142, %v1138
    %v1144 = vmul.f32 1.0, %v1143
    %v1145 = vtanh.pop %v1124
    %v1146 = vmul.f32 %v1144, %v1025
    %1148 = vrot.lane.b32.xlu0 %v1145, 32
    %v1149 = vpop.permute.xlu0 %1148
    %v1151 = vmul.f32 %v1144, %v1149
    %1153 = vrot.lane.b32.xlu0 %v1151, 32
    %v1154 = vpop.permute.xlu0 %1153
    %v1156 = vadd.f32 %v1146, %v1154
    %v1157 = vtanh.pop %v1156
    %1159 = vrot.lane.b32.xlu0 %v1157, 32
    %v1160 = vpop.permute.xlu0 %1159
    %v1162 = vmul.f32 %v1144, %v1160
    %v1163 = vld [vmem:[%s6] sm:$0xff]
    %v1164 = vld [vmem:[%s6 + $0x8] sm:$0xff]
    %v1165 = vld [vmem:[%s6 + $0x10] sm:$0xff]
    %v1166 = vld [vmem:[%s6 + $0x18] sm:$0xff]
    %s1167 = sld [smem:[#allocation3]]
    %v1168 = vstv %s1167
    %1170 = vrot.lane.b32.xlu0 %v1162, 64
    %v1171 = vpop.permute.xlu0 %1170
    %v1172 = vsel %vm185, %v1171, 0
    %1174 = vmatpush.msra.mxu0 0.0
    %1175 = vmatpush.msra.mxu0 0.0
    %1176 = vmatpush.msra.mxu0 0.0
    %1177 = vmatpush.msra.mxu0 0.0
    %1178 = vmatpush.msra.mxu0 0.0
    %1179 = vmatpush.msra.mxu0 0.0
    %1180 = vmatpush.msra.mxu0 0.0
    %1181 = vmatpush.msra.mxu0 0.0
    %1182 = vmatpush.msra.mxu0 0.0
    %1183 = vmatpush.msra.mxu0 0.0
    %1184 = vmatpush.msra.mxu0 0.0
    %1185 = vmatpush.msra.mxu0 0.0
    %1186 = vmatpush.msra.mxu0 %v1166
    %1187 = vmatpush.msra.mxu0 %v1165
    %1188 = vmatpush.msra.mxu0 %v1164
    %1189 = vmatpush.msra.mxu0 %v1163
    %1190 = vmatmul.f32.gmra.mxu0 %v1172
    %v1191 = vpop.f32.mrf.mxu0
    %v1192 = vadd.f32 %v1168, %v1191
    %1193 = vdwg.mxu0
    %vm1194 = vcmask 7168
    %1195 = vst.msk [vmem:[%s8] sm:$0xff] %vm1194, %v1192
    // Predicated region
    $region38: #{tpu_custom_call.1} parent=1 // pred_check
      _
    $region39: #{tpu_custom_call.1} parent=1 // pred_check_branch
      %1197 = sbr.rel (0) target = $region41
    $region40: #{tpu_custom_call.1} parent=1 // pred_region
      _
    $region41: #{tpu_custom_call.1} parent=1 // pred_fallthru
      _
    // Predicated region
    $region42: #{tpu_custom_call.1} parent=1 // pred_check
      _
    $region43: #{tpu_custom_call.1} parent=1 // pred_check_branch
      %1199 = sbr.rel (0) target = $region45
    $region44: #{tpu_custom_call.1} parent=1 // pred_region
      _
    $region45: #{tpu_custom_call.1} parent=1 // pred_fallthru
      _
    %1200 = vsyncpa [#allocation5], 1

</llo_original>
